<compile_context>
chip_gen: v5e
topology: v5e:2x2
jax: 0.10.0
libtpu: 0.0.40
codegen_flags: <defaults>
</compile_context>

<pallas_src>
import jax
import jax.numpy as jnp
import numpy as np
from jax.experimental import pallas as pl
from jax.experimental.pallas import tpu as pltpu

# ----- BasicModel(params) hyper-parameters (small, deterministic) -----
CONVFILTERS = 32              # params.convfilters
FILTERSIZE = 5                # params.filtersize (odd -> symmetric 'same' pad)
POOL_SIZE = 2                 # params.pool_size
STRIDES = 2                   # params.strides
LSTMNODES = 16                # params.lstmnodes
N_TASKS = 2 * LSTMNODES - 1   # 31

N = 2                         # batch
L = 16                        # sequence length
IN_CH = 4                     # one-hot DNA channels

K = FILTERSIZE
PAD_C = (K - 1) // 2                       # conv 'same' padding
KS = POOL_SIZE + 1                         # MaxPool1d kernel_size = 3
STRIDE = STRIDES + 1                       # MaxPool1d stride      = 3
PAD_P = POOL_SIZE // 2                     # MaxPool1d padding     = 1
LP = (L + 2 * PAD_P - KS) // STRIDE + 1    # pooled length         = 6
C = CONVFILTERS
C3 = 3 * C


# --------------------------------------------------------------------------
# Single fused kernel: conv + relu + maxpool + biGRU + FFN + heads + sigmoid
# --------------------------------------------------------------------------
def fused_kernel(x_ref, wc_ref, bc_ref,
                 wif_ref, bif_ref, wib_ref, bib_ref,
                 whh_ref, bhh_ref,
                 g_ref, beta_ref, w1_ref, b1_ref, w2_ref, b2_ref,
                 wp_ref, bp_ref, wh_ref, bh_ref,
                 out_ref,
                 xpad_ref, pooled_ref, hf_ref, hb_ref):
    f32 = jnp.float32

    # ---- Conv1d(4 -> C, 'same') as one im2col matmul + ReLU --------------
    # In-kernel zero halo (replaces the host-side jnp.pad).
    xpad_ref[...] = jnp.zeros_like(xpad_ref)
    xpad_ref[:, PAD_C:PAD_C + L, :] = x_ref[...]
    xpad = xpad_ref[...]                                    # (N, L+2*PAD_C, 4)
    xcol = jnp.concatenate(
        [xpad[:, k:k + L, :].reshape(N * L, IN_CH) for k in range(K)],
        axis=-1)                                            # (N*L, K*IN_CH)
    conv = jnp.maximum(
        jnp.dot(xcol, wc_ref[...], preferred_element_type=f32) + bc_ref[...],
        0.0)                                                # (N*L, C)
    conv = conv.reshape(N, L, C)

    # ---- MaxPool1d(kernel=3, stride=3, padding=1) -------------------------
    # torch pads max-pool with -inf, so clipping the window to in-range rows
    # is exactly equivalent (padded elements never win the max).
    for j in range(LP):
        lo = max(0, j * STRIDE - PAD_P)
        hi = min(L, j * STRIDE - PAD_P + KS)
        # time-major rows: row index = j * N + n
        pooled_ref[j * N:(j + 1) * N, :] = jnp.max(conv[:, lo:hi, :], axis=1)

    pooled = pooled_ref[...]                                # (LP*N, C)

    # ---- Bidirectional GRU: both directions fused in one time loop --------
    # Packed input projections for every timestep (gate order r | z | n).
    xf = jnp.dot(pooled, wif_ref[...], preferred_element_type=f32) + bif_ref[...]
    xb = jnp.dot(pooled, wib_ref[...], preferred_element_type=f32) + bib_ref[...]

    # Hidden state: columns [0:C] forward, [C:2C] backward.
    H = jnp.zeros((N, 2 * C), f32)
    for t in range(LP):                                     # LP = 6, static unroll
        # single block-diagonal recurrent matmul for both directions:
        # (N, 2C) @ (2C, 6C) -> [fwd r|z|n | bwd r|z|n]
        g = jnp.dot(H, whh_ref[...], preferred_element_type=f32) + bhh_ref[...]
        gf, gb = g[:, :C3], g[:, C3:]

        tb = LP - 1 - t                                     # backward time index
        xft = xf[t * N:(t + 1) * N, :]                      # (N, 3C)
        xbt = xb[tb * N:(tb + 1) * N, :]                    # (N, 3C)

        rf = jax.nn.sigmoid(xft[:, :C] + gf[:, :C])
        zf = jax.nn.sigmoid(xft[:, C:2 * C] + gf[:, C:2 * C])
        nf = jnp.tanh(xft[:, 2 * C:] + rf * gf[:, 2 * C:])
        hfn = (1.0 - zf) * nf + zf * H[:, :C]

        rb = jax.nn.sigmoid(xbt[:, :C] + gb[:, :C])
        zb = jax.nn.sigmoid(xbt[:, C:2 * C] + gb[:, C:2 * C])
        nb = jnp.tanh(xbt[:, 2 * C:] + rb * gb[:, 2 * C:])
        hbn = (1.0 - zb) * nb + zb * H[:, C:]

        H = jnp.concatenate([hfn, hbn], axis=-1)
        hf_ref[t * N:(t + 1) * N, :] = hfn                  # fwd output at time t
        hb_ref[tb * N:(tb + 1) * N, :] = hbn                # bwd output at time tb

    # GRU output = sum of the two direction halves.
    hsum = hf_ref[...] + hb_ref[...]                        # (LP*N, C)

    # ---- FeedForwardBlock: LayerNorm -> Linear(C,2C)+ReLU -> Linear(2C,C) -
    mu = jnp.mean(hsum, axis=-1, keepdims=True)
    var = jnp.mean(jnp.square(hsum - mu), axis=-1, keepdims=True)
    xhat = (hsum - mu) * jax.lax.rsqrt(var + 1e-5) * g_ref[...] + beta_ref[...]
    h1 = jnp.maximum(
        jnp.dot(xhat, w1_ref[...], preferred_element_type=f32) + b1_ref[...], 0.0)
    h2 = jnp.dot(h1, w2_ref[...], preferred_element_type=f32) + b2_ref[...]

    # ---- pooled_embedding head: 1x1 conv (C -> N_TASKS) + avg pool --------
    z1 = jnp.dot(h2, wp_ref[...], preferred_element_type=f32) + bp_ref[...]  # (LP*N, 31)
    pe = z1[0:N, :]
    for t in range(1, LP):
        pe = pe + z1[t * N:(t + 1) * N, :]
    pe = pe * (1.0 / LP)                                    # (N, N_TASKS)

    # ---- final head: 1x1 conv (N_TASKS -> 1), avg pool (len 1), sigmoid ---
    z2 = jnp.dot(pe, wh_ref[...], preferred_element_type=f32) + bh_ref[...]  # (N, 1)
    out_ref[...] = jax.nn.sigmoid(z2).reshape(N, 1, 1)


@jax.jit
def basic_model_forward(x, P):
    # ---- host-side weight packing (layout plumbing only) ------------------
    wc = P["w_taps"].reshape(K * IN_CH, C)                  # im2col conv weight

    def pack_w(w):   # (3, C, C) -> (C, 3C), gate order r | z | n
        return jnp.concatenate([w[0], w[1], w[2]], axis=1)

    def pack_b(b):   # (3, 1, C) -> (1, 3C)
        return jnp.concatenate([b[0], b[1], b[2]], axis=1)

    wif, bif = pack_w(P["wih_f"]), pack_b(P["bih_f"])
    wib, bib = pack_w(P["wih_b"]), pack_b(P["bih_b"])
    whf, whb = pack_w(P["whh_f"]), pack_w(P["whh_b"])
    # block-diagonal recurrent weight: rows[:C] -> fwd gates, rows[C:] -> bwd gates
    whh_bd = jnp.zeros((2 * C, 2 * C3), jnp.float32)
    whh_bd = whh_bd.at[:C, :C3].set(whf).at[C:, C3:].set(whb)
    bhh = jnp.concatenate([pack_b(P["bhh_f"]), pack_b(P["bhh_b"])], axis=1)

    return pl.pallas_call(
        fused_kernel,
        out_shape=jax.ShapeDtypeStruct((N, 1, 1), jnp.float32),
        scratch_shapes=[
            pltpu.VMEM((N, L + 2 * PAD_C, IN_CH), jnp.float32),  # padded input
            pltpu.VMEM((LP * N, C), jnp.float32),                # pooled (time-major)
            pltpu.VMEM((LP * N, C), jnp.float32),                # fwd hidden states
            pltpu.VMEM((LP * N, C), jnp.float32),                # bwd hidden states
        ],
    )(x, wc, P["b_conv"],
      wif, bif, wib, bib, whh_bd, bhh,
      P["ln_g"], P["ln_b"], P["w1"], P["b1"], P["w2"], P["b2"],
      P["wp"], P["bp"], P["wh"], P["bh"])


# --------------------------------------------------------------------------
# Pure-JAX reference (mirrors the PyTorch forward semantics, unpacked params)
# --------------------------------------------------------------------------
def reference_forward(x, P):
    xp = jnp.pad(x, ((0, 0), (PAD_C, PAD_C), (0, 0)))
    conv = jnp.zeros((N, L, C), jnp.float32)
    for k in range(K):
        conv = conv + jnp.einsum("nli,io->nlo", xp[:, k:k + L, :], P["w_taps"][k])
    conv = jax.nn.relu(conv + P["b_conv"])
    y = jnp.pad(conv, ((0, 0), (PAD_P, PAD_P), (0, 0)), constant_values=-jnp.inf)
    pooled = jnp.stack(
        [jnp.max(y[:, j * STRIDE:j * STRIDE + KS, :], axis=1) for j in range(LP)],
        axis=1)

    def gru_dir(xseq, wih, whh, bih, bhh, reverse):
        seq = xseq[:, ::-1, :] if reverse else xseq

        def step(h, xt):
            r = jax.nn.sigmoid(xt @ wih[0] + bih[0] + h @ whh[0] + bhh[0])
            z = jax.nn.sigmoid(xt @ wih[1] + bih[1] + h @ whh[1] + bhh[1])
            n = jnp.tanh(xt @ wih[2] + bih[2] + r * (h @ whh[2] + bhh[2]))
            h = (1.0 - z) * n + z * h
            return h, h

        h0 = jnp.zeros((N, C), jnp.float32)
        _, hs = jax.lax.scan(step, h0, jnp.swapaxes(seq, 0, 1))
        hs = jnp.swapaxes(hs, 0, 1)
        return hs[:, ::-1, :] if reverse else hs

    hf = gru_dir(pooled, P["wih_f"], P["whh_f"], P["bih_f"], P["bhh_f"], False)
    hb = gru_dir(pooled, P["wih_b"], P["whh_b"], P["bih_b"], P["bhh_b"], True)
    hsum = hf + hb
    mu = hsum.mean(-1, keepdims=True)
    var = ((hsum - mu) ** 2).mean(-1, keepdims=True)
    xhat = (hsum - mu) / jnp.sqrt(var + 1e-5) * P["ln_g"] + P["ln_b"]
    h1 = jax.nn.relu(xhat @ P["w1"] + P["b1"])
    h2 = h1 @ P["w2"] + P["b2"]
    z1 = h2 @ P["wp"] + P["bp"]
    pe = z1.mean(axis=1, keepdims=True)
    z2 = pe @ P["wh"] + P["bh"]
    return jax.nn.sigmoid(z2)


# --------------------------------------------------------------------------
def make_params(key):
    ks = jax.random.split(key, 21)

    def rn(k, shape, scale=0.1):
        return scale * jax.random.normal(k, shape, dtype=jnp.float32)

    return dict(
        w_taps=rn(ks[0], (K, IN_CH, C)),        # conv1 weight, per-tap (in, out)
        b_conv=rn(ks[1], (1, C)),
        wih_f=rn(ks[2], (3, C, C)), whh_f=rn(ks[3], (3, C, C)),
        bih_f=rn(ks[4], (3, 1, C)), bhh_f=rn(ks[5], (3, 1, C)),
        wih_b=rn(ks[6], (3, C, C)), whh_b=rn(ks[7], (3, C, C)),
        bih_b=rn(ks[8], (3, 1, C)), bhh_b=rn(ks[9], (3, 1, C)),
        ln_g=1.0 + rn(ks[10], (1, C)), ln_b=rn(ks[11], (1, C)),
        w1=rn(ks[12], (C, 2 * C)), b1=rn(ks[13], (1, 2 * C)),
        w2=rn(ks[14], (2 * C, C)), b2=rn(ks[15], (1, C)),
        wp=rn(ks[16], (C, N_TASKS)), bp=rn(ks[17], (1, N_TASKS)),
        wh=rn(ks[18], (N_TASKS, 1)), bh=rn(ks[19], (1, 1)),
    )


if __name__ == "__main__":
    key = jax.random.PRNGKey(0)
    kx, kp = jax.random.split(key)
    x = jax.random.normal(kx, (N, L, IN_CH), dtype=jnp.float32)
    P = make_params(kp)

    out = jax.block_until_ready(basic_model_forward(x, P))
    assert out.shape == (N, 1, 1)

    ref = jax.block_until_ready(reference_forward(x, P))
    np.testing.assert_allclose(np.asarray(out), np.asarray(ref),
                               rtol=1e-3, atol=1e-3)
    print("KERNEL_OK")
</pallas_src>

<mosaic_0001>
module attributes {stable_mosaic.version = 11 : i64} {
  func.func @fused_kernel(%arg0: memref<2x16x4xf32, #tpu.memory_space<vmem>>, %arg1: memref<20x32xf32, #tpu.memory_space<vmem>>, %arg2: memref<1x32xf32, #tpu.memory_space<vmem>>, %arg3: memref<32x96xf32, #tpu.memory_space<vmem>>, %arg4: memref<1x96xf32, #tpu.memory_space<vmem>>, %arg5: memref<32x96xf32, #tpu.memory_space<vmem>>, %arg6: memref<1x96xf32, #tpu.memory_space<vmem>>, %arg7: memref<64x192xf32, #tpu.memory_space<vmem>>, %arg8: memref<1x192xf32, #tpu.memory_space<vmem>>, %arg9: memref<1x32xf32, #tpu.memory_space<vmem>>, %arg10: memref<1x32xf32, #tpu.memory_space<vmem>>, %arg11: memref<32x64xf32, #tpu.memory_space<vmem>>, %arg12: memref<1x64xf32, #tpu.memory_space<vmem>>, %arg13: memref<64x32xf32, #tpu.memory_space<vmem>>, %arg14: memref<1x32xf32, #tpu.memory_space<vmem>>, %arg15: memref<32x31xf32, #tpu.memory_space<vmem>>, %arg16: memref<1x31xf32, #tpu.memory_space<vmem>>, %arg17: memref<31x1xf32, #tpu.memory_space<vmem>>, %arg18: memref<1x1xf32, #tpu.memory_space<vmem>>, %arg19: memref<2x1x1xf32, #tpu.memory_space<vmem>>, %arg20: memref<2x20x4xf32, #tpu.memory_space<vmem>>, %arg21: memref<12x32xf32, #tpu.memory_space<vmem>>, %arg22: memref<12x32xf32, #tpu.memory_space<vmem>>, %arg23: memref<12x32xf32, #tpu.memory_space<vmem>>) attributes {dimension_semantics = [], scalar_prefetch = 0 : i64, scratch_operands = 4 : i64, tpu.core_type = #tpu.core_type<tc>} {
    %cst = arith.constant 0.000000e+00 : f32
    %0 = vector.broadcast %cst : f32 to vector<2x20x4xf32>
    %c0 = arith.constant 0 : index
    %c0_0 = arith.constant 0 : index
    %c0_1 = arith.constant 0 : index
    %1 = vector.load %arg20[%c0, %c0_0, %c0_1] : memref<2x20x4xf32, #tpu.memory_space<vmem>>, vector<2x20x4xf32>
    tpu.vector_store %arg20[%c0, %c0_0, %c0_1], %0 {strides = array<i32>} : memref<2x20x4xf32, #tpu.memory_space<vmem>>, vector<2x20x4xf32>,
    %c0_2 = arith.constant 0 : index
    %c0_3 = arith.constant 0 : index
    %c0_4 = arith.constant 0 : index
    %2 = vector.load %arg0[%c0_2, %c0_3, %c0_4] : memref<2x16x4xf32, #tpu.memory_space<vmem>>, vector<2x16x4xf32>
    %c0_5 = arith.constant 0 : index
    %c2 = arith.constant 2 : index
    %c0_6 = arith.constant 0 : index
    %3 = vector.load %arg20[%c0_5, %c2, %c0_6] : memref<2x20x4xf32, #tpu.memory_space<vmem>>, vector<2x16x4xf32>
    tpu.vector_store %arg20[%c0_5, %c2, %c0_6], %2 {strides = array<i32>} : memref<2x20x4xf32, #tpu.memory_space<vmem>>, vector<2x16x4xf32>,
    %c0_7 = arith.constant 0 : index
    %c0_8 = arith.constant 0 : index
    %c0_9 = arith.constant 0 : index
    %4 = vector.load %arg20[%c0_7, %c0_8, %c0_9] : memref<2x20x4xf32, #tpu.memory_space<vmem>>, vector<2x20x4xf32>
    %5 = vector.extract_strided_slice %4 {offsets = [0, 0, 0], sizes = [2, 16, 4], strides = [1, 1, 1]} : vector<2x20x4xf32> to vector<2x16x4xf32>
    %6 = vector.shape_cast %5 : vector<2x16x4xf32> to vector<32x4xf32>
    %7 = vector.extract_strided_slice %4 {offsets = [0, 1, 0], sizes = [2, 16, 4], strides = [1, 1, 1]} : vector<2x20x4xf32> to vector<2x16x4xf32>
    %8 = vector.shape_cast %7 : vector<2x16x4xf32> to vector<32x4xf32>
    %9 = vector.extract_strided_slice %4 {offsets = [0, 2, 0], sizes = [2, 16, 4], strides = [1, 1, 1]} : vector<2x20x4xf32> to vector<2x16x4xf32>
    %10 = vector.shape_cast %9 : vector<2x16x4xf32> to vector<32x4xf32>
    %11 = vector.extract_strided_slice %4 {offsets = [0, 3, 0], sizes = [2, 16, 4], strides = [1, 1, 1]} : vector<2x20x4xf32> to vector<2x16x4xf32>
    %12 = vector.shape_cast %11 : vector<2x16x4xf32> to vector<32x4xf32>
    %13 = vector.extract_strided_slice %4 {offsets = [0, 4, 0], sizes = [2, 16, 4], strides = [1, 1, 1]} : vector<2x20x4xf32> to vector<2x16x4xf32>
    %14 = vector.shape_cast %13 : vector<2x16x4xf32> to vector<32x4xf32>
    %15 = tpu.concatenate %6, %8, %10, %12, %14 in 1 : vector<32x4xf32>, vector<32x4xf32>, vector<32x4xf32>, vector<32x4xf32>, vector<32x4xf32> -> vector<32x20xf32>
    %c0_10 = arith.constant 0 : index
    %c0_11 = arith.constant 0 : index
    %16 = vector.load %arg1[%c0_10, %c0_11] : memref<20x32xf32, #tpu.memory_space<vmem>>, vector<20x32xf32>
    %cst_12 = arith.constant dense<0.000000e+00> : vector<32x32xf32>
    %17 = tpu.matmul %15, %16, %cst_12 {dimension_numbers = #tpu.dot_dimension_numbers<[1], [0], [0], [1], [0, 0, 1, 1], [], []>} : vector<32x20xf32>, vector<20x32xf32>, vector<32x32xf32> -> vector<32x32xf32>
    %c0_13 = arith.constant 0 : index
    %c0_14 = arith.constant 0 : index
    %18 = vector.load %arg2[%c0_13, %c0_14] : memref<1x32xf32, #tpu.memory_space<vmem>>, vector<1x32xf32>
    %19 = vector.broadcast %18 : vector<1x32xf32> to vector<32x32xf32>
    %20 = arith.addf %17, %19 : vector<32x32xf32>
    %cst_15 = arith.constant 0.000000e+00 : f32
    %21 = vector.broadcast %cst_15 : f32 to vector<32x32xf32>
    %22 = arith.maximumf %20, %21 : vector<32x32xf32>
    %23 = vector.shape_cast %22 : vector<32x32xf32> to vector<2x16x32xf32>
    %24 = vector.extract_strided_slice %23 {offsets = [0, 0, 0], sizes = [2, 2, 32], strides = [1, 1, 1]} : vector<2x16x32xf32> to vector<2x2x32xf32>
    %cst_16 = arith.constant dense<0xFF800000> : vector<2x32xf32>
    %25 = vector.multi_reduction <maximumf>, %24, %cst_16 [1] : vector<2x2x32xf32> to vector<2x32xf32>
    %c0_17 = arith.constant 0 : index
    %c0_18 = arith.constant 0 : index
    %26 = vector.load %arg21[%c0_17, %c0_18] : memref<12x32xf32, #tpu.memory_space<vmem>>, vector<2x32xf32>
    tpu.vector_store %arg21[%c0_17, %c0_18], %25 {strides = array<i32>} : memref<12x32xf32, #tpu.memory_space<vmem>>, vector<2x32xf32>,
    %27 = vector.extract_strided_slice %23 {offsets = [0, 2, 0], sizes = [2, 3, 32], strides = [1, 1, 1]} : vector<2x16x32xf32> to vector<2x3x32xf32>
    %cst_19 = arith.constant dense<0xFF800000> : vector<2x32xf32>
    %28 = vector.multi_reduction <maximumf>, %27, %cst_19 [1] : vector<2x3x32xf32> to vector<2x32xf32>
    %c2_20 = arith.constant 2 : index
    %c0_21 = arith.constant 0 : index
    %29 = vector.load %arg21[%c2_20, %c0_21] : memref<12x32xf32, #tpu.memory_space<vmem>>, vector<2x32xf32>
    tpu.vector_store %arg21[%c2_20, %c0_21], %28 {strides = array<i32>} : memref<12x32xf32, #tpu.memory_space<vmem>>, vector<2x32xf32>,
    %30 = vector.extract_strided_slice %23 {offsets = [0, 5, 0], sizes = [2, 3, 32], strides = [1, 1, 1]} : vector<2x16x32xf32> to vector<2x3x32xf32>
    %cst_22 = arith.constant dense<0xFF800000> : vector<2x32xf32>
    %31 = vector.multi_reduction <maximumf>, %30, %cst_22 [1] : vector<2x3x32xf32> to vector<2x32xf32>
    %c4 = arith.constant 4 : index
    %c0_23 = arith.constant 0 : index
    %32 = vector.load %arg21[%c4, %c0_23] : memref<12x32xf32, #tpu.memory_space<vmem>>, vector<2x32xf32>
    tpu.vector_store %arg21[%c4, %c0_23], %31 {strides = array<i32>} : memref<12x32xf32, #tpu.memory_space<vmem>>, vector<2x32xf32>,
    %33 = vector.extract_strided_slice %23 {offsets = [0, 8, 0], sizes = [2, 3, 32], strides = [1, 1, 1]} : vector<2x16x32xf32> to vector<2x3x32xf32>
    %cst_24 = arith.constant dense<0xFF800000> : vector<2x32xf32>
    %34 = vector.multi_reduction <maximumf>, %33, %cst_24 [1] : vector<2x3x32xf32> to vector<2x32xf32>
    %c6 = arith.constant 6 : index
    %c0_25 = arith.constant 0 : index
    %35 = vector.load %arg21[%c6, %c0_25] : memref<12x32xf32, #tpu.memory_space<vmem>>, vector<2x32xf32>
    tpu.vector_store %arg21[%c6, %c0_25], %34 {strides = array<i32>} : memref<12x32xf32, #tpu.memory_space<vmem>>, vector<2x32xf32>,
    %36 = vector.extract_strided_slice %23 {offsets = [0, 11, 0], sizes = [2, 3, 32], strides = [1, 1, 1]} : vector<2x16x32xf32> to vector<2x3x32xf32>
    %cst_26 = arith.constant dense<0xFF800000> : vector<2x32xf32>
    %37 = vector.multi_reduction <maximumf>, %36, %cst_26 [1] : vector<2x3x32xf32> to vector<2x32xf32>
    %c8 = arith.constant 8 : index
    %c0_27 = arith.constant 0 : index
    %38 = vector.load %arg21[%c8, %c0_27] : memref<12x32xf32, #tpu.memory_space<vmem>>, vector<2x32xf32>
    tpu.vector_store %arg21[%c8, %c0_27], %37 {strides = array<i32>} : memref<12x32xf32, #tpu.memory_space<vmem>>, vector<2x32xf32>,
    %39 = vector.extract_strided_slice %23 {offsets = [0, 14, 0], sizes = [2, 2, 32], strides = [1, 1, 1]} : vector<2x16x32xf32> to vector<2x2x32xf32>
    %cst_28 = arith.constant dense<0xFF800000> : vector<2x32xf32>
    %40 = vector.multi_reduction <maximumf>, %39, %cst_28 [1] : vector<2x2x32xf32> to vector<2x32xf32>
    %c10 = arith.constant 10 : index
    %c0_29 = arith.constant 0 : index
    %41 = vector.load %arg21[%c10, %c0_29] : memref<12x32xf32, #tpu.memory_space<vmem>>, vector<2x32xf32>
    tpu.vector_store %arg21[%c10, %c0_29], %40 {strides = array<i32>} : memref<12x32xf32, #tpu.memory_space<vmem>>, vector<2x32xf32>,
    %c0_30 = arith.constant 0 : index
    %c0_31 = arith.constant 0 : index
    %42 = vector.load %arg21[%c0_30, %c0_31] : memref<12x32xf32, #tpu.memory_space<vmem>>, vector<12x32xf32>
    %c0_32 = arith.constant 0 : index
    %c0_33 = arith.constant 0 : index
    %43 = vector.load %arg3[%c0_32, %c0_33] : memref<32x96xf32, #tpu.memory_space<vmem>>, vector<32x96xf32>
    %cst_34 = arith.constant dense<0.000000e+00> : vector<12x96xf32>
    %44 = tpu.matmul %42, %43, %cst_34 {dimension_numbers = #tpu.dot_dimension_numbers<[1], [0], [0], [1], [0, 0, 1, 1], [], []>} : vector<12x32xf32>, vector<32x96xf32>, vector<12x96xf32> -> vector<12x96xf32>
    %c0_35 = arith.constant 0 : index
    %c0_36 = arith.constant 0 : index
    %45 = vector.load %arg4[%c0_35, %c0_36] : memref<1x96xf32, #tpu.memory_space<vmem>>, vector<1x96xf32>
    %46 = vector.broadcast %45 : vector<1x96xf32> to vector<12x96xf32>
    %47 = arith.addf %44, %46 : vector<12x96xf32>
    %c0_37 = arith.constant 0 : index
    %c0_38 = arith.constant 0 : index
    %48 = vector.load %arg5[%c0_37, %c0_38] : memref<32x96xf32, #tpu.memory_space<vmem>>, vector<32x96xf32>
    %cst_39 = arith.constant dense<0.000000e+00> : vector<12x96xf32>
    %49 = tpu.matmul %42, %48, %cst_39 {dimension_numbers = #tpu.dot_dimension_numbers<[1], [0], [0], [1], [0, 0, 1, 1], [], []>} : vector<12x32xf32>, vector<32x96xf32>, vector<12x96xf32> -> vector<12x96xf32>
    %c0_40 = arith.constant 0 : index
    %c0_41 = arith.constant 0 : index
    %50 = vector.load %arg6[%c0_40, %c0_41] : memref<1x96xf32, #tpu.memory_space<vmem>>, vector<1x96xf32>
    %51 = vector.broadcast %50 : vector<1x96xf32> to vector<12x96xf32>
    %52 = arith.addf %49, %51 : vector<12x96xf32>
    %cst_42 = arith.constant 0.000000e+00 : f32
    %53 = vector.broadcast %cst_42 : f32 to vector<2x64xf32>
    %c0_43 = arith.constant 0 : index
    %c0_44 = arith.constant 0 : index
    %54 = vector.load %arg7[%c0_43, %c0_44] : memref<64x192xf32, #tpu.memory_space<vmem>>, vector<64x192xf32>
    %cst_45 = arith.constant dense<0.000000e+00> : vector<2x192xf32>
    %55 = tpu.matmul %53, %54, %cst_45 {dimension_numbers = #tpu.dot_dimension_numbers<[1], [0], [0], [1], [0, 0, 1, 1], [], []>} : vector<2x64xf32>, vector<64x192xf32>, vector<2x192xf32> -> vector<2x192xf32>
    %c0_46 = arith.constant 0 : index
    %c0_47 = arith.constant 0 : index
    %56 = vector.load %arg8[%c0_46, %c0_47] : memref<1x192xf32, #tpu.memory_space<vmem>>, vector<1x192xf32>
    %57 = vector.broadcast %56 : vector<1x192xf32> to vector<2x192xf32>
    %58 = arith.addf %55, %57 : vector<2x192xf32>
    %59 = vector.extract_strided_slice %58 {offsets = [0, 0], sizes = [2, 96], strides = [1, 1]} : vector<2x192xf32> to vector<2x96xf32>
    %60 = vector.extract_strided_slice %58 {offsets = [0, 96], sizes = [2, 96], strides = [1, 1]} : vector<2x192xf32> to vector<2x96xf32>
    %61 = vector.extract_strided_slice %47 {offsets = [0, 0], sizes = [2, 96], strides = [1, 1]} : vector<12x96xf32> to vector<2x96xf32>
    %62 = vector.extract_strided_slice %52 {offsets = [10, 0], sizes = [2, 96], strides = [1, 1]} : vector<12x96xf32> to vector<2x96xf32>
    %63 = vector.extract_strided_slice %61 {offsets = [0, 0], sizes = [2, 32], strides = [1, 1]} : vector<2x96xf32> to vector<2x32xf32>
    %64 = vector.extract_strided_slice %59 {offsets = [0, 0], sizes = [2, 32], strides = [1, 1]} : vector<2x96xf32> to vector<2x32xf32>
    %65 = arith.addf %63, %64 : vector<2x32xf32>
    %66 = arith.negf %65 : vector<2x32xf32>
    %67 = math.exp %66 : vector<2x32xf32>
    %cst_48 = arith.constant 1.000000e+00 : f32
    %68 = vector.broadcast %cst_48 : f32 to vector<2x32xf32>
    %69 = arith.addf %68, %67 : vector<2x32xf32>
    %70 = arith.divf %68, %69 : vector<2x32xf32>
    %71 = vector.extract_strided_slice %61 {offsets = [0, 32], sizes = [2, 32], strides = [1, 1]} : vector<2x96xf32> to vector<2x32xf32>
    %72 = vector.extract_strided_slice %59 {offsets = [0, 32], sizes = [2, 32], strides = [1, 1]} : vector<2x96xf32> to vector<2x32xf32>
    %73 = arith.addf %71, %72 : vector<2x32xf32>
    %74 = arith.negf %73 : vector<2x32xf32>
    %75 = math.exp %74 : vector<2x32xf32>
    %cst_49 = arith.constant 1.000000e+00 : f32
    %76 = vector.broadcast %cst_49 : f32 to vector<2x32xf32>
    %77 = arith.addf %76, %75 : vector<2x32xf32>
    %78 = arith.divf %76, %77 : vector<2x32xf32>
    %79 = vector.extract_strided_slice %61 {offsets = [0, 64], sizes = [2, 32], strides = [1, 1]} : vector<2x96xf32> to vector<2x32xf32>
    %80 = vector.extract_strided_slice %59 {offsets = [0, 64], sizes = [2, 32], strides = [1, 1]} : vector<2x96xf32> to vector<2x32xf32>
    %81 = arith.mulf %70, %80 : vector<2x32xf32>
    %82 = arith.addf %79, %81 : vector<2x32xf32>
    %83 = math.tanh %82 : vector<2x32xf32>
    %cst_50 = arith.constant 1.000000e+00 : f32
    %84 = vector.broadcast %cst_50 : f32 to vector<2x32xf32>
    %85 = arith.subf %84, %78 : vector<2x32xf32>
    %86 = arith.mulf %85, %83 : vector<2x32xf32>
    %87 = vector.extract_strided_slice %53 {offsets = [0, 0], sizes = [2, 32], strides = [1, 1]} : vector<2x64xf32> to vector<2x32xf32>
    %88 = arith.mulf %78, %87 : vector<2x32xf32>
    %89 = arith.addf %86, %88 : vector<2x32xf32>
    %90 = vector.extract_strided_slice %62 {offsets = [0, 0], sizes = [2, 32], strides = [1, 1]} : vector<2x96xf32> to vector<2x32xf32>
    %91 = vector.extract_strided_slice %60 {offsets = [0, 0], sizes = [2, 32], strides = [1, 1]} : vector<2x96xf32> to vector<2x32xf32>
    %92 = arith.addf %90, %91 : vector<2x32xf32>
    %93 = arith.negf %92 : vector<2x32xf32>
    %94 = math.exp %93 : vector<2x32xf32>
    %cst_51 = arith.constant 1.000000e+00 : f32
    %95 = vector.broadcast %cst_51 : f32 to vector<2x32xf32>
    %96 = arith.addf %95, %94 : vector<2x32xf32>
    %97 = arith.divf %95, %96 : vector<2x32xf32>
    %98 = vector.extract_strided_slice %62 {offsets = [0, 32], sizes = [2, 32], strides = [1, 1]} : vector<2x96xf32> to vector<2x32xf32>
    %99 = vector.extract_strided_slice %60 {offsets = [0, 32], sizes = [2, 32], strides = [1, 1]} : vector<2x96xf32> to vector<2x32xf32>
    %100 = arith.addf %98, %99 : vector<2x32xf32>
    %101 = arith.negf %100 : vector<2x32xf32>
    %102 = math.exp %101 : vector<2x32xf32>
    %cst_52 = arith.constant 1.000000e+00 : f32
    %103 = vector.broadcast %cst_52 : f32 to vector<2x32xf32>
    %104 = arith.addf %103, %102 : vector<2x32xf32>
    %105 = arith.divf %103, %104 : vector<2x32xf32>
    %106 = vector.extract_strided_slice %62 {offsets = [0, 64], sizes = [2, 32], strides = [1, 1]} : vector<2x96xf32> to vector<2x32xf32>
    %107 = vector.extract_strided_slice %60 {offsets = [0, 64], sizes = [2, 32], strides = [1, 1]} : vector<2x96xf32> to vector<2x32xf32>
    %108 = arith.mulf %97, %107 : vector<2x32xf32>
    %109 = arith.addf %106, %108 : vector<2x32xf32>
    %110 = math.tanh %109 : vector<2x32xf32>
    %cst_53 = arith.constant 1.000000e+00 : f32
    %111 = vector.broadcast %cst_53 : f32 to vector<2x32xf32>
    %112 = arith.subf %111, %105 : vector<2x32xf32>
    %113 = arith.mulf %112, %110 : vector<2x32xf32>
    %114 = vector.extract_strided_slice %53 {offsets = [0, 32], sizes = [2, 32], strides = [1, 1]} : vector<2x64xf32> to vector<2x32xf32>
    %115 = arith.mulf %105, %114 : vector<2x32xf32>
    %116 = arith.addf %113, %115 : vector<2x32xf32>
    %117 = tpu.concatenate %89, %116 in 1 : vector<2x32xf32>, vector<2x32xf32> -> vector<2x64xf32>
    %c0_54 = arith.constant 0 : index
    %c0_55 = arith.constant 0 : index
    %118 = vector.load %arg22[%c0_54, %c0_55] : memref<12x32xf32, #tpu.memory_space<vmem>>, vector<2x32xf32>
    tpu.vector_store %arg22[%c0_54, %c0_55], %89 {strides = array<i32>} : memref<12x32xf32, #tpu.memory_space<vmem>>, vector<2x32xf32>,
    %c10_56 = arith.constant 10 : index
    %c0_57 = arith.constant 0 : index
    %119 = vector.load %arg23[%c10_56, %c0_57] : memref<12x32xf32, #tpu.memory_space<vmem>>, vector<2x32xf32>
    tpu.vector_store %arg23[%c10_56, %c0_57], %116 {strides = array<i32>} : memref<12x32xf32, #tpu.memory_space<vmem>>, vector<2x32xf32>,
    %c0_58 = arith.constant 0 : index
    %c0_59 = arith.constant 0 : index
    %120 = vector.load %arg7[%c0_58, %c0_59] : memref<64x192xf32, #tpu.memory_space<vmem>>, vector<64x192xf32>
    %cst_60 = arith.constant dense<0.000000e+00> : vector<2x192xf32>
    %121 = tpu.matmul %117, %120, %cst_60 {dimension_numbers = #tpu.dot_dimension_numbers<[1], [0], [0], [1], [0, 0, 1, 1], [], []>} : vector<2x64xf32>, vector<64x192xf32>, vector<2x192xf32> -> vector<2x192xf32>
    %c0_61 = arith.constant 0 : index
    %c0_62 = arith.constant 0 : index
    %122 = vector.load %arg8[%c0_61, %c0_62] : memref<1x192xf32, #tpu.memory_space<vmem>>, vector<1x192xf32>
    %123 = vector.broadcast %122 : vector<1x192xf32> to vector<2x192xf32>
    %124 = arith.addf %121, %123 : vector<2x192xf32>
    %125 = vector.extract_strided_slice %124 {offsets = [0, 0], sizes = [2, 96], strides = [1, 1]} : vector<2x192xf32> to vector<2x96xf32>
    %126 = vector.extract_strided_slice %124 {offsets = [0, 96], sizes = [2, 96], strides = [1, 1]} : vector<2x192xf32> to vector<2x96xf32>
    %127 = vector.extract_strided_slice %47 {offsets = [2, 0], sizes = [2, 96], strides = [1, 1]} : vector<12x96xf32> to vector<2x96xf32>
    %128 = vector.extract_strided_slice %52 {offsets = [8, 0], sizes = [2, 96], strides = [1, 1]} : vector<12x96xf32> to vector<2x96xf32>
    %129 = vector.extract_strided_slice %127 {offsets = [0, 0], sizes = [2, 32], strides = [1, 1]} : vector<2x96xf32> to vector<2x32xf32>
    %130 = vector.extract_strided_slice %125 {offsets = [0, 0], sizes = [2, 32], strides = [1, 1]} : vector<2x96xf32> to vector<2x32xf32>
    %131 = arith.addf %129, %130 : vector<2x32xf32>
    %132 = arith.negf %131 : vector<2x32xf32>
    %133 = math.exp %132 : vector<2x32xf32>
    %cst_63 = arith.constant 1.000000e+00 : f32
    %134 = vector.broadcast %cst_63 : f32 to vector<2x32xf32>
    %135 = arith.addf %134, %133 : vector<2x32xf32>
    %136 = arith.divf %134, %135 : vector<2x32xf32>
    %137 = vector.extract_strided_slice %127 {offsets = [0, 32], sizes = [2, 32], strides = [1, 1]} : vector<2x96xf32> to vector<2x32xf32>
    %138 = vector.extract_strided_slice %125 {offsets = [0, 32], sizes = [2, 32], strides = [1, 1]} : vector<2x96xf32> to vector<2x32xf32>
    %139 = arith.addf %137, %138 : vector<2x32xf32>
    %140 = arith.negf %139 : vector<2x32xf32>
    %141 = math.exp %140 : vector<2x32xf32>
    %cst_64 = arith.constant 1.000000e+00 : f32
    %142 = vector.broadcast %cst_64 : f32 to vector<2x32xf32>
    %143 = arith.addf %142, %141 : vector<2x32xf32>
    %144 = arith.divf %142, %143 : vector<2x32xf32>
    %145 = vector.extract_strided_slice %127 {offsets = [0, 64], sizes = [2, 32], strides = [1, 1]} : vector<2x96xf32> to vector<2x32xf32>
    %146 = vector.extract_strided_slice %125 {offsets = [0, 64], sizes = [2, 32], strides = [1, 1]} : vector<2x96xf32> to vector<2x32xf32>
    %147 = arith.mulf %136, %146 : vector<2x32xf32>
    %148 = arith.addf %145, %147 : vector<2x32xf32>
    %149 = math.tanh %148 : vector<2x32xf32>
    %cst_65 = arith.constant 1.000000e+00 : f32
    %150 = vector.broadcast %cst_65 : f32 to vector<2x32xf32>
    %151 = arith.subf %150, %144 : vector<2x32xf32>
    %152 = arith.mulf %151, %149 : vector<2x32xf32>
    %153 = vector.extract_strided_slice %117 {offsets = [0, 0], sizes = [2, 32], strides = [1, 1]} : vector<2x64xf32> to vector<2x32xf32>
    %154 = arith.mulf %144, %153 : vector<2x32xf32>
    %155 = arith.addf %152, %154 : vector<2x32xf32>
    %156 = vector.extract_strided_slice %128 {offsets = [0, 0], sizes = [2, 32], strides = [1, 1]} : vector<2x96xf32> to vector<2x32xf32>
    %157 = vector.extract_strided_slice %126 {offsets = [0, 0], sizes = [2, 32], strides = [1, 1]} : vector<2x96xf32> to vector<2x32xf32>
    %158 = arith.addf %156, %157 : vector<2x32xf32>
    %159 = arith.negf %158 : vector<2x32xf32>
    %160 = math.exp %159 : vector<2x32xf32>
    %cst_66 = arith.constant 1.000000e+00 : f32
    %161 = vector.broadcast %cst_66 : f32 to vector<2x32xf32>
    %162 = arith.addf %161, %160 : vector<2x32xf32>
    %163 = arith.divf %161, %162 : vector<2x32xf32>
    %164 = vector.extract_strided_slice %128 {offsets = [0, 32], sizes = [2, 32], strides = [1, 1]} : vector<2x96xf32> to vector<2x32xf32>
    %165 = vector.extract_strided_slice %126 {offsets = [0, 32], sizes = [2, 32], strides = [1, 1]} : vector<2x96xf32> to vector<2x32xf32>
    %166 = arith.addf %164, %165 : vector<2x32xf32>
    %167 = arith.negf %166 : vector<2x32xf32>
    %168 = math.exp %167 : vector<2x32xf32>
    %cst_67 = arith.constant 1.000000e+00 : f32
    %169 = vector.broadcast %cst_67 : f32 to vector<2x32xf32>
    %170 = arith.addf %169, %168 : vector<2x32xf32>
    %171 = arith.divf %169, %170 : vector<2x32xf32>
    %172 = vector.extract_strided_slice %128 {offsets = [0, 64], sizes = [2, 32], strides = [1, 1]} : vector<2x96xf32> to vector<2x32xf32>
    %173 = vector.extract_strided_slice %126 {offsets = [0, 64], sizes = [2, 32], strides = [1, 1]} : vector<2x96xf32> to vector<2x32xf32>
    %174 = arith.mulf %163, %173 : vector<2x32xf32>
    %175 = arith.addf %172, %174 : vector<2x32xf32>
    %176 = math.tanh %175 : vector<2x32xf32>
    %cst_68 = arith.constant 1.000000e+00 : f32
    %177 = vector.broadcast %cst_68 : f32 to vector<2x32xf32>
    %178 = arith.subf %177, %171 : vector<2x32xf32>
    %179 = arith.mulf %178, %176 : vector<2x32xf32>
    %180 = vector.extract_strided_slice %117 {offsets = [0, 32], sizes = [2, 32], strides = [1, 1]} : vector<2x64xf32> to vector<2x32xf32>
    %181 = arith.mulf %171, %180 : vector<2x32xf32>
    %182 = arith.addf %179, %181 : vector<2x32xf32>
    %183 = tpu.concatenate %155, %182 in 1 : vector<2x32xf32>, vector<2x32xf32> -> vector<2x64xf32>
    %c2_69 = arith.constant 2 : index
    %c0_70 = arith.constant 0 : index
    %184 = vector.load %arg22[%c2_69, %c0_70] : memref<12x32xf32, #tpu.memory_space<vmem>>, vector<2x32xf32>
    tpu.vector_store %arg22[%c2_69, %c0_70], %155 {strides = array<i32>} : memref<12x32xf32, #tpu.memory_space<vmem>>, vector<2x32xf32>,
    %c8_71 = arith.constant 8 : index
    %c0_72 = arith.constant 0 : index
    %185 = vector.load %arg23[%c8_71, %c0_72] : memref<12x32xf32, #tpu.memory_space<vmem>>, vector<2x32xf32>
    tpu.vector_store %arg23[%c8_71, %c0_72], %182 {strides = array<i32>} : memref<12x32xf32, #tpu.memory_space<vmem>>, vector<2x32xf32>,
    %c0_73 = arith.constant 0 : index
    %c0_74 = arith.constant 0 : index
    %186 = vector.load %arg7[%c0_73, %c0_74] : memref<64x192xf32, #tpu.memory_space<vmem>>, vector<64x192xf32>
    %cst_75 = arith.constant dense<0.000000e+00> : vector<2x192xf32>
    %187 = tpu.matmul %183, %186, %cst_75 {dimension_numbers = #tpu.dot_dimension_numbers<[1], [0], [0], [1], [0, 0, 1, 1], [], []>} : vector<2x64xf32>, vector<64x192xf32>, vector<2x192xf32> -> vector<2x192xf32>
    %c0_76 = arith.constant 0 : index
    %c0_77 = arith.constant 0 : index
    %188 = vector.load %arg8[%c0_76, %c0_77] : memref<1x192xf32, #tpu.memory_space<vmem>>, vector<1x192xf32>
    %189 = vector.broadcast %188 : vector<1x192xf32> to vector<2x192xf32>
    %190 = arith.addf %187, %189 : vector<2x192xf32>
    %191 = vector.extract_strided_slice %190 {offsets = [0, 0], sizes = [2, 96], strides = [1, 1]} : vector<2x192xf32> to vector<2x96xf32>
    %192 = vector.extract_strided_slice %190 {offsets = [0, 96], sizes = [2, 96], strides = [1, 1]} : vector<2x192xf32> to vector<2x96xf32>
    %193 = vector.extract_strided_slice %47 {offsets = [4, 0], sizes = [2, 96], strides = [1, 1]} : vector<12x96xf32> to vector<2x96xf32>
    %194 = vector.extract_strided_slice %52 {offsets = [6, 0], sizes = [2, 96], strides = [1, 1]} : vector<12x96xf32> to vector<2x96xf32>
    %195 = vector.extract_strided_slice %193 {offsets = [0, 0], sizes = [2, 32], strides = [1, 1]} : vector<2x96xf32> to vector<2x32xf32>
    %196 = vector.extract_strided_slice %191 {offsets = [0, 0], sizes = [2, 32], strides = [1, 1]} : vector<2x96xf32> to vector<2x32xf32>
    %197 = arith.addf %195, %196 : vector<2x32xf32>
    %198 = arith.negf %197 : vector<2x32xf32>
    %199 = math.exp %198 : vector<2x32xf32>
    %cst_78 = arith.constant 1.000000e+00 : f32
    %200 = vector.broadcast %cst_78 : f32 to vector<2x32xf32>
    %201 = arith.addf %200, %199 : vector<2x32xf32>
    %202 = arith.divf %200, %201 : vector<2x32xf32>
    %203 = vector.extract_strided_slice %193 {offsets = [0, 32], sizes = [2, 32], strides = [1, 1]} : vector<2x96xf32> to vector<2x32xf32>
    %204 = vector.extract_strided_slice %191 {offsets = [0, 32], sizes = [2, 32], strides = [1, 1]} : vector<2x96xf32> to vector<2x32xf32>
    %205 = arith.addf %203, %204 : vector<2x32xf32>
    %206 = arith.negf %205 : vector<2x32xf32>
    %207 = math.exp %206 : vector<2x32xf32>
    %cst_79 = arith.constant 1.000000e+00 : f32
    %208 = vector.broadcast %cst_79 : f32 to vector<2x32xf32>
    %209 = arith.addf %208, %207 : vector<2x32xf32>
    %210 = arith.divf %208, %209 : vector<2x32xf32>
    %211 = vector.extract_strided_slice %193 {offsets = [0, 64], sizes = [2, 32], strides = [1, 1]} : vector<2x96xf32> to vector<2x32xf32>
    %212 = vector.extract_strided_slice %191 {offsets = [0, 64], sizes = [2, 32], strides = [1, 1]} : vector<2x96xf32> to vector<2x32xf32>
    %213 = arith.mulf %202, %212 : vector<2x32xf32>
    %214 = arith.addf %211, %213 : vector<2x32xf32>
    %215 = math.tanh %214 : vector<2x32xf32>
    %cst_80 = arith.constant 1.000000e+00 : f32
    %216 = vector.broadcast %cst_80 : f32 to vector<2x32xf32>
    %217 = arith.subf %216, %210 : vector<2x32xf32>
    %218 = arith.mulf %217, %215 : vector<2x32xf32>
    %219 = vector.extract_strided_slice %183 {offsets = [0, 0], sizes = [2, 32], strides = [1, 1]} : vector<2x64xf32> to vector<2x32xf32>
    %220 = arith.mulf %210, %219 : vector<2x32xf32>
    %221 = arith.addf %218, %220 : vector<2x32xf32>
    %222 = vector.extract_strided_slice %194 {offsets = [0, 0], sizes = [2, 32], strides = [1, 1]} : vector<2x96xf32> to vector<2x32xf32>
    %223 = vector.extract_strided_slice %192 {offsets = [0, 0], sizes = [2, 32], strides = [1, 1]} : vector<2x96xf32> to vector<2x32xf32>
    %224 = arith.addf %222, %223 : vector<2x32xf32>
    %225 = arith.negf %224 : vector<2x32xf32>
    %226 = math.exp %225 : vector<2x32xf32>
    %cst_81 = arith.constant 1.000000e+00 : f32
    %227 = vector.broadcast %cst_81 : f32 to vector<2x32xf32>
    %228 = arith.addf %227, %226 : vector<2x32xf32>
    %229 = arith.divf %227, %228 : vector<2x32xf32>
    %230 = vector.extract_strided_slice %194 {offsets = [0, 32], sizes = [2, 32], strides = [1, 1]} : vector<2x96xf32> to vector<2x32xf32>
    %231 = vector.extract_strided_slice %192 {offsets = [0, 32], sizes = [2, 32], strides = [1, 1]} : vector<2x96xf32> to vector<2x32xf32>
    %232 = arith.addf %230, %231 : vector<2x32xf32>
    %233 = arith.negf %232 : vector<2x32xf32>
    %234 = math.exp %233 : vector<2x32xf32>
    %cst_82 = arith.constant 1.000000e+00 : f32
    %235 = vector.broadcast %cst_82 : f32 to vector<2x32xf32>
    %236 = arith.addf %235, %234 : vector<2x32xf32>
    %237 = arith.divf %235, %236 : vector<2x32xf32>
    %238 = vector.extract_strided_slice %194 {offsets = [0, 64], sizes = [2, 32], strides = [1, 1]} : vector<2x96xf32> to vector<2x32xf32>
    %239 = vector.extract_strided_slice %192 {offsets = [0, 64], sizes = [2, 32], strides = [1, 1]} : vector<2x96xf32> to vector<2x32xf32>
    %240 = arith.mulf %229, %239 : vector<2x32xf32>
    %241 = arith.addf %238, %240 : vector<2x32xf32>
    %242 = math.tanh %241 : vector<2x32xf32>
    %cst_83 = arith.constant 1.000000e+00 : f32
    %243 = vector.broadcast %cst_83 : f32 to vector<2x32xf32>
    %244 = arith.subf %243, %237 : vector<2x32xf32>
    %245 = arith.mulf %244, %242 : vector<2x32xf32>
    %246 = vector.extract_strided_slice %183 {offsets = [0, 32], sizes = [2, 32], strides = [1, 1]} : vector<2x64xf32> to vector<2x32xf32>
    %247 = arith.mulf %237, %246 : vector<2x32xf32>
    %248 = arith.addf %245, %247 : vector<2x32xf32>
    %249 = tpu.concatenate %221, %248 in 1 : vector<2x32xf32>, vector<2x32xf32> -> vector<2x64xf32>
    %c4_84 = arith.constant 4 : index
    %c0_85 = arith.constant 0 : index
    %250 = vector.load %arg22[%c4_84, %c0_85] : memref<12x32xf32, #tpu.memory_space<vmem>>, vector<2x32xf32>
    tpu.vector_store %arg22[%c4_84, %c0_85], %221 {strides = array<i32>} : memref<12x32xf32, #tpu.memory_space<vmem>>, vector<2x32xf32>,
    %c6_86 = arith.constant 6 : index
    %c0_87 = arith.constant 0 : index
    %251 = vector.load %arg23[%c6_86, %c0_87] : memref<12x32xf32, #tpu.memory_space<vmem>>, vector<2x32xf32>
    tpu.vector_store %arg23[%c6_86, %c0_87], %248 {strides = array<i32>} : memref<12x32xf32, #tpu.memory_space<vmem>>, vector<2x32xf32>,
    %c0_88 = arith.constant 0 : index
    %c0_89 = arith.constant 0 : index
    %252 = vector.load %arg7[%c0_88, %c0_89] : memref<64x192xf32, #tpu.memory_space<vmem>>, vector<64x192xf32>
    %cst_90 = arith.constant dense<0.000000e+00> : vector<2x192xf32>
    %253 = tpu.matmul %249, %252, %cst_90 {dimension_numbers = #tpu.dot_dimension_numbers<[1], [0], [0], [1], [0, 0, 1, 1], [], []>} : vector<2x64xf32>, vector<64x192xf32>, vector<2x192xf32> -> vector<2x192xf32>
    %c0_91 = arith.constant 0 : index
    %c0_92 = arith.constant 0 : index
    %254 = vector.load %arg8[%c0_91, %c0_92] : memref<1x192xf32, #tpu.memory_space<vmem>>, vector<1x192xf32>
    %255 = vector.broadcast %254 : vector<1x192xf32> to vector<2x192xf32>
    %256 = arith.addf %253, %255 : vector<2x192xf32>
    %257 = vector.extract_strided_slice %256 {offsets = [0, 0], sizes = [2, 96], strides = [1, 1]} : vector<2x192xf32> to vector<2x96xf32>
    %258 = vector.extract_strided_slice %256 {offsets = [0, 96], sizes = [2, 96], strides = [1, 1]} : vector<2x192xf32> to vector<2x96xf32>
    %259 = vector.extract_strided_slice %47 {offsets = [6, 0], sizes = [2, 96], strides = [1, 1]} : vector<12x96xf32> to vector<2x96xf32>
    %260 = vector.extract_strided_slice %52 {offsets = [4, 0], sizes = [2, 96], strides = [1, 1]} : vector<12x96xf32> to vector<2x96xf32>
    %261 = vector.extract_strided_slice %259 {offsets = [0, 0], sizes = [2, 32], strides = [1, 1]} : vector<2x96xf32> to vector<2x32xf32>
    %262 = vector.extract_strided_slice %257 {offsets = [0, 0], sizes = [2, 32], strides = [1, 1]} : vector<2x96xf32> to vector<2x32xf32>
    %263 = arith.addf %261, %262 : vector<2x32xf32>
    %264 = arith.negf %263 : vector<2x32xf32>
    %265 = math.exp %264 : vector<2x32xf32>
    %cst_93 = arith.constant 1.000000e+00 : f32
    %266 = vector.broadcast %cst_93 : f32 to vector<2x32xf32>
    %267 = arith.addf %266, %265 : vector<2x32xf32>
    %268 = arith.divf %266, %267 : vector<2x32xf32>
    %269 = vector.extract_strided_slice %259 {offsets = [0, 32], sizes = [2, 32], strides = [1, 1]} : vector<2x96xf32> to vector<2x32xf32>
    %270 = vector.extract_strided_slice %257 {offsets = [0, 32], sizes = [2, 32], strides = [1, 1]} : vector<2x96xf32> to vector<2x32xf32>
    %271 = arith.addf %269, %270 : vector<2x32xf32>
    %272 = arith.negf %271 : vector<2x32xf32>
    %273 = math.exp %272 : vector<2x32xf32>
    %cst_94 = arith.constant 1.000000e+00 : f32
    %274 = vector.broadcast %cst_94 : f32 to vector<2x32xf32>
    %275 = arith.addf %274, %273 : vector<2x32xf32>
    %276 = arith.divf %274, %275 : vector<2x32xf32>
    %277 = vector.extract_strided_slice %259 {offsets = [0, 64], sizes = [2, 32], strides = [1, 1]} : vector<2x96xf32> to vector<2x32xf32>
    %278 = vector.extract_strided_slice %257 {offsets = [0, 64], sizes = [2, 32], strides = [1, 1]} : vector<2x96xf32> to vector<2x32xf32>
    %279 = arith.mulf %268, %278 : vector<2x32xf32>
    %280 = arith.addf %277, %279 : vector<2x32xf32>
    %281 = math.tanh %280 : vector<2x32xf32>
    %cst_95 = arith.constant 1.000000e+00 : f32
    %282 = vector.broadcast %cst_95 : f32 to vector<2x32xf32>
    %283 = arith.subf %282, %276 : vector<2x32xf32>
    %284 = arith.mulf %283, %281 : vector<2x32xf32>
    %285 = vector.extract_strided_slice %249 {offsets = [0, 0], sizes = [2, 32], strides = [1, 1]} : vector<2x64xf32> to vector<2x32xf32>
    %286 = arith.mulf %276, %285 : vector<2x32xf32>
    %287 = arith.addf %284, %286 : vector<2x32xf32>
    %288 = vector.extract_strided_slice %260 {offsets = [0, 0], sizes = [2, 32], strides = [1, 1]} : vector<2x96xf32> to vector<2x32xf32>
    %289 = vector.extract_strided_slice %258 {offsets = [0, 0], sizes = [2, 32], strides = [1, 1]} : vector<2x96xf32> to vector<2x32xf32>
    %290 = arith.addf %288, %289 : vector<2x32xf32>
    %291 = arith.negf %290 : vector<2x32xf32>
    %292 = math.exp %291 : vector<2x32xf32>
    %cst_96 = arith.constant 1.000000e+00 : f32
    %293 = vector.broadcast %cst_96 : f32 to vector<2x32xf32>
    %294 = arith.addf %293, %292 : vector<2x32xf32>
    %295 = arith.divf %293, %294 : vector<2x32xf32>
    %296 = vector.extract_strided_slice %260 {offsets = [0, 32], sizes = [2, 32], strides = [1, 1]} : vector<2x96xf32> to vector<2x32xf32>
    %297 = vector.extract_strided_slice %258 {offsets = [0, 32], sizes = [2, 32], strides = [1, 1]} : vector<2x96xf32> to vector<2x32xf32>
    %298 = arith.addf %296, %297 : vector<2x32xf32>
    %299 = arith.negf %298 : vector<2x32xf32>
    %300 = math.exp %299 : vector<2x32xf32>
    %cst_97 = arith.constant 1.000000e+00 : f32
    %301 = vector.broadcast %cst_97 : f32 to vector<2x32xf32>
    %302 = arith.addf %301, %300 : vector<2x32xf32>
    %303 = arith.divf %301, %302 : vector<2x32xf32>
    %304 = vector.extract_strided_slice %260 {offsets = [0, 64], sizes = [2, 32], strides = [1, 1]} : vector<2x96xf32> to vector<2x32xf32>
    %305 = vector.extract_strided_slice %258 {offsets = [0, 64], sizes = [2, 32], strides = [1, 1]} : vector<2x96xf32> to vector<2x32xf32>
    %306 = arith.mulf %295, %305 : vector<2x32xf32>
    %307 = arith.addf %304, %306 : vector<2x32xf32>
    %308 = math.tanh %307 : vector<2x32xf32>
    %cst_98 = arith.constant 1.000000e+00 : f32
    %309 = vector.broadcast %cst_98 : f32 to vector<2x32xf32>
    %310 = arith.subf %309, %303 : vector<2x32xf32>
    %311 = arith.mulf %310, %308 : vector<2x32xf32>
    %312 = vector.extract_strided_slice %249 {offsets = [0, 32], sizes = [2, 32], strides = [1, 1]} : vector<2x64xf32> to vector<2x32xf32>
    %313 = arith.mulf %303, %312 : vector<2x32xf32>
    %314 = arith.addf %311, %313 : vector<2x32xf32>
    %315 = tpu.concatenate %287, %314 in 1 : vector<2x32xf32>, vector<2x32xf32> -> vector<2x64xf32>
    %c6_99 = arith.constant 6 : index
    %c0_100 = arith.constant 0 : index
    %316 = vector.load %arg22[%c6_99, %c0_100] : memref<12x32xf32, #tpu.memory_space<vmem>>, vector<2x32xf32>
    tpu.vector_store %arg22[%c6_99, %c0_100], %287 {strides = array<i32>} : memref<12x32xf32, #tpu.memory_space<vmem>>, vector<2x32xf32>,
    %c4_101 = arith.constant 4 : index
    %c0_102 = arith.constant 0 : index
    %317 = vector.load %arg23[%c4_101, %c0_102] : memref<12x32xf32, #tpu.memory_space<vmem>>, vector<2x32xf32>
    tpu.vector_store %arg23[%c4_101, %c0_102], %314 {strides = array<i32>} : memref<12x32xf32, #tpu.memory_space<vmem>>, vector<2x32xf32>,
    %c0_103 = arith.constant 0 : index
    %c0_104 = arith.constant 0 : index
    %318 = vector.load %arg7[%c0_103, %c0_104] : memref<64x192xf32, #tpu.memory_space<vmem>>, vector<64x192xf32>
    %cst_105 = arith.constant dense<0.000000e+00> : vector<2x192xf32>
    %319 = tpu.matmul %315, %318, %cst_105 {dimension_numbers = #tpu.dot_dimension_numbers<[1], [0], [0], [1], [0, 0, 1, 1], [], []>} : vector<2x64xf32>, vector<64x192xf32>, vector<2x192xf32> -> vector<2x192xf32>
    %c0_106 = arith.constant 0 : index
    %c0_107 = arith.constant 0 : index
    %320 = vector.load %arg8[%c0_106, %c0_107] : memref<1x192xf32, #tpu.memory_space<vmem>>, vector<1x192xf32>
    %321 = vector.broadcast %320 : vector<1x192xf32> to vector<2x192xf32>
    %322 = arith.addf %319, %321 : vector<2x192xf32>
    %323 = vector.extract_strided_slice %322 {offsets = [0, 0], sizes = [2, 96], strides = [1, 1]} : vector<2x192xf32> to vector<2x96xf32>
    %324 = vector.extract_strided_slice %322 {offsets = [0, 96], sizes = [2, 96], strides = [1, 1]} : vector<2x192xf32> to vector<2x96xf32>
    %325 = vector.extract_strided_slice %47 {offsets = [8, 0], sizes = [2, 96], strides = [1, 1]} : vector<12x96xf32> to vector<2x96xf32>
    %326 = vector.extract_strided_slice %52 {offsets = [2, 0], sizes = [2, 96], strides = [1, 1]} : vector<12x96xf32> to vector<2x96xf32>
    %327 = vector.extract_strided_slice %325 {offsets = [0, 0], sizes = [2, 32], strides = [1, 1]} : vector<2x96xf32> to vector<2x32xf32>
    %328 = vector.extract_strided_slice %323 {offsets = [0, 0], sizes = [2, 32], strides = [1, 1]} : vector<2x96xf32> to vector<2x32xf32>
    %329 = arith.addf %327, %328 : vector<2x32xf32>
    %330 = arith.negf %329 : vector<2x32xf32>
    %331 = math.exp %330 : vector<2x32xf32>
    %cst_108 = arith.constant 1.000000e+00 : f32
    %332 = vector.broadcast %cst_108 : f32 to vector<2x32xf32>
    %333 = arith.addf %332, %331 : vector<2x32xf32>
    %334 = arith.divf %332, %333 : vector<2x32xf32>
    %335 = vector.extract_strided_slice %325 {offsets = [0, 32], sizes = [2, 32], strides = [1, 1]} : vector<2x96xf32> to vector<2x32xf32>
    %336 = vector.extract_strided_slice %323 {offsets = [0, 32], sizes = [2, 32], strides = [1, 1]} : vector<2x96xf32> to vector<2x32xf32>
    %337 = arith.addf %335, %336 : vector<2x32xf32>
    %338 = arith.negf %337 : vector<2x32xf32>
    %339 = math.exp %338 : vector<2x32xf32>
    %cst_109 = arith.constant 1.000000e+00 : f32
    %340 = vector.broadcast %cst_109 : f32 to vector<2x32xf32>
    %341 = arith.addf %340, %339 : vector<2x32xf32>
    %342 = arith.divf %340, %341 : vector<2x32xf32>
    %343 = vector.extract_strided_slice %325 {offsets = [0, 64], sizes = [2, 32], strides = [1, 1]} : vector<2x96xf32> to vector<2x32xf32>
    %344 = vector.extract_strided_slice %323 {offsets = [0, 64], sizes = [2, 32], strides = [1, 1]} : vector<2x96xf32> to vector<2x32xf32>
    %345 = arith.mulf %334, %344 : vector<2x32xf32>
    %346 = arith.addf %343, %345 : vector<2x32xf32>
    %347 = math.tanh %346 : vector<2x32xf32>
    %cst_110 = arith.constant 1.000000e+00 : f32
    %348 = vector.broadcast %cst_110 : f32 to vector<2x32xf32>
    %349 = arith.subf %348, %342 : vector<2x32xf32>
    %350 = arith.mulf %349, %347 : vector<2x32xf32>
    %351 = vector.extract_strided_slice %315 {offsets = [0, 0], sizes = [2, 32], strides = [1, 1]} : vector<2x64xf32> to vector<2x32xf32>
    %352 = arith.mulf %342, %351 : vector<2x32xf32>
    %353 = arith.addf %350, %352 : vector<2x32xf32>
    %354 = vector.extract_strided_slice %326 {offsets = [0, 0], sizes = [2, 32], strides = [1, 1]} : vector<2x96xf32> to vector<2x32xf32>
    %355 = vector.extract_strided_slice %324 {offsets = [0, 0], sizes = [2, 32], strides = [1, 1]} : vector<2x96xf32> to vector<2x32xf32>
    %356 = arith.addf %354, %355 : vector<2x32xf32>
    %357 = arith.negf %356 : vector<2x32xf32>
    %358 = math.exp %357 : vector<2x32xf32>
    %cst_111 = arith.constant 1.000000e+00 : f32
    %359 = vector.broadcast %cst_111 : f32 to vector<2x32xf32>
    %360 = arith.addf %359, %358 : vector<2x32xf32>
    %361 = arith.divf %359, %360 : vector<2x32xf32>
    %362 = vector.extract_strided_slice %326 {offsets = [0, 32], sizes = [2, 32], strides = [1, 1]} : vector<2x96xf32> to vector<2x32xf32>
    %363 = vector.extract_strided_slice %324 {offsets = [0, 32], sizes = [2, 32], strides = [1, 1]} : vector<2x96xf32> to vector<2x32xf32>
    %364 = arith.addf %362, %363 : vector<2x32xf32>
    %365 = arith.negf %364 : vector<2x32xf32>
    %366 = math.exp %365 : vector<2x32xf32>
    %cst_112 = arith.constant 1.000000e+00 : f32
    %367 = vector.broadcast %cst_112 : f32 to vector<2x32xf32>
    %368 = arith.addf %367, %366 : vector<2x32xf32>
    %369 = arith.divf %367, %368 : vector<2x32xf32>
    %370 = vector.extract_strided_slice %326 {offsets = [0, 64], sizes = [2, 32], strides = [1, 1]} : vector<2x96xf32> to vector<2x32xf32>
    %371 = vector.extract_strided_slice %324 {offsets = [0, 64], sizes = [2, 32], strides = [1, 1]} : vector<2x96xf32> to vector<2x32xf32>
    %372 = arith.mulf %361, %371 : vector<2x32xf32>
    %373 = arith.addf %370, %372 : vector<2x32xf32>
    %374 = math.tanh %373 : vector<2x32xf32>
    %cst_113 = arith.constant 1.000000e+00 : f32
    %375 = vector.broadcast %cst_113 : f32 to vector<2x32xf32>
    %376 = arith.subf %375, %369 : vector<2x32xf32>
    %377 = arith.mulf %376, %374 : vector<2x32xf32>
    %378 = vector.extract_strided_slice %315 {offsets = [0, 32], sizes = [2, 32], strides = [1, 1]} : vector<2x64xf32> to vector<2x32xf32>
    %379 = arith.mulf %369, %378 : vector<2x32xf32>
    %380 = arith.addf %377, %379 : vector<2x32xf32>
    %381 = tpu.concatenate %353, %380 in 1 : vector<2x32xf32>, vector<2x32xf32> -> vector<2x64xf32>
    %c8_114 = arith.constant 8 : index
    %c0_115 = arith.constant 0 : index
    %382 = vector.load %arg22[%c8_114, %c0_115] : memref<12x32xf32, #tpu.memory_space<vmem>>, vector<2x32xf32>
    tpu.vector_store %arg22[%c8_114, %c0_115], %353 {strides = array<i32>} : memref<12x32xf32, #tpu.memory_space<vmem>>, vector<2x32xf32>,
    %c2_116 = arith.constant 2 : index
    %c0_117 = arith.constant 0 : index
    %383 = vector.load %arg23[%c2_116, %c0_117] : memref<12x32xf32, #tpu.memory_space<vmem>>, vector<2x32xf32>
    tpu.vector_store %arg23[%c2_116, %c0_117], %380 {strides = array<i32>} : memref<12x32xf32, #tpu.memory_space<vmem>>, vector<2x32xf32>,
    %c0_118 = arith.constant 0 : index
    %c0_119 = arith.constant 0 : index
    %384 = vector.load %arg7[%c0_118, %c0_119] : memref<64x192xf32, #tpu.memory_space<vmem>>, vector<64x192xf32>
    %cst_120 = arith.constant dense<0.000000e+00> : vector<2x192xf32>
    %385 = tpu.matmul %381, %384, %cst_120 {dimension_numbers = #tpu.dot_dimension_numbers<[1], [0], [0], [1], [0, 0, 1, 1], [], []>} : vector<2x64xf32>, vector<64x192xf32>, vector<2x192xf32> -> vector<2x192xf32>
    %c0_121 = arith.constant 0 : index
    %c0_122 = arith.constant 0 : index
    %386 = vector.load %arg8[%c0_121, %c0_122] : memref<1x192xf32, #tpu.memory_space<vmem>>, vector<1x192xf32>
    %387 = vector.broadcast %386 : vector<1x192xf32> to vector<2x192xf32>
    %388 = arith.addf %385, %387 : vector<2x192xf32>
    %389 = vector.extract_strided_slice %388 {offsets = [0, 0], sizes = [2, 96], strides = [1, 1]} : vector<2x192xf32> to vector<2x96xf32>
    %390 = vector.extract_strided_slice %388 {offsets = [0, 96], sizes = [2, 96], strides = [1, 1]} : vector<2x192xf32> to vector<2x96xf32>
    %391 = vector.extract_strided_slice %47 {offsets = [10, 0], sizes = [2, 96], strides = [1, 1]} : vector<12x96xf32> to vector<2x96xf32>
    %392 = vector.extract_strided_slice %52 {offsets = [0, 0], sizes = [2, 96], strides = [1, 1]} : vector<12x96xf32> to vector<2x96xf32>
    %393 = vector.extract_strided_slice %391 {offsets = [0, 0], sizes = [2, 32], strides = [1, 1]} : vector<2x96xf32> to vector<2x32xf32>
    %394 = vector.extract_strided_slice %389 {offsets = [0, 0], sizes = [2, 32], strides = [1, 1]} : vector<2x96xf32> to vector<2x32xf32>
    %395 = arith.addf %393, %394 : vector<2x32xf32>
    %396 = arith.negf %395 : vector<2x32xf32>
    %397 = math.exp %396 : vector<2x32xf32>
    %cst_123 = arith.constant 1.000000e+00 : f32
    %398 = vector.broadcast %cst_123 : f32 to vector<2x32xf32>
    %399 = arith.addf %398, %397 : vector<2x32xf32>
    %400 = arith.divf %398, %399 : vector<2x32xf32>
    %401 = vector.extract_strided_slice %391 {offsets = [0, 32], sizes = [2, 32], strides = [1, 1]} : vector<2x96xf32> to vector<2x32xf32>
    %402 = vector.extract_strided_slice %389 {offsets = [0, 32], sizes = [2, 32], strides = [1, 1]} : vector<2x96xf32> to vector<2x32xf32>
    %403 = arith.addf %401, %402 : vector<2x32xf32>
    %404 = arith.negf %403 : vector<2x32xf32>
    %405 = math.exp %404 : vector<2x32xf32>
    %cst_124 = arith.constant 1.000000e+00 : f32
    %406 = vector.broadcast %cst_124 : f32 to vector<2x32xf32>
    %407 = arith.addf %406, %405 : vector<2x32xf32>
    %408 = arith.divf %406, %407 : vector<2x32xf32>
    %409 = vector.extract_strided_slice %391 {offsets = [0, 64], sizes = [2, 32], strides = [1, 1]} : vector<2x96xf32> to vector<2x32xf32>
    %410 = vector.extract_strided_slice %389 {offsets = [0, 64], sizes = [2, 32], strides = [1, 1]} : vector<2x96xf32> to vector<2x32xf32>
    %411 = arith.mulf %400, %410 : vector<2x32xf32>
    %412 = arith.addf %409, %411 : vector<2x32xf32>
    %413 = math.tanh %412 : vector<2x32xf32>
    %cst_125 = arith.constant 1.000000e+00 : f32
    %414 = vector.broadcast %cst_125 : f32 to vector<2x32xf32>
    %415 = arith.subf %414, %408 : vector<2x32xf32>
    %416 = arith.mulf %415, %413 : vector<2x32xf32>
    %417 = vector.extract_strided_slice %381 {offsets = [0, 0], sizes = [2, 32], strides = [1, 1]} : vector<2x64xf32> to vector<2x32xf32>
    %418 = arith.mulf %408, %417 : vector<2x32xf32>
    %419 = arith.addf %416, %418 : vector<2x32xf32>
    %420 = vector.extract_strided_slice %392 {offsets = [0, 0], sizes = [2, 32], strides = [1, 1]} : vector<2x96xf32> to vector<2x32xf32>
    %421 = vector.extract_strided_slice %390 {offsets = [0, 0], sizes = [2, 32], strides = [1, 1]} : vector<2x96xf32> to vector<2x32xf32>
    %422 = arith.addf %420, %421 : vector<2x32xf32>
    %423 = arith.negf %422 : vector<2x32xf32>
    %424 = math.exp %423 : vector<2x32xf32>
    %cst_126 = arith.constant 1.000000e+00 : f32
    %425 = vector.broadcast %cst_126 : f32 to vector<2x32xf32>
    %426 = arith.addf %425, %424 : vector<2x32xf32>
    %427 = arith.divf %425, %426 : vector<2x32xf32>
    %428 = vector.extract_strided_slice %392 {offsets = [0, 32], sizes = [2, 32], strides = [1, 1]} : vector<2x96xf32> to vector<2x32xf32>
    %429 = vector.extract_strided_slice %390 {offsets = [0, 32], sizes = [2, 32], strides = [1, 1]} : vector<2x96xf32> to vector<2x32xf32>
    %430 = arith.addf %428, %429 : vector<2x32xf32>
    %431 = arith.negf %430 : vector<2x32xf32>
    %432 = math.exp %431 : vector<2x32xf32>
    %cst_127 = arith.constant 1.000000e+00 : f32
    %433 = vector.broadcast %cst_127 : f32 to vector<2x32xf32>
    %434 = arith.addf %433, %432 : vector<2x32xf32>
    %435 = arith.divf %433, %434 : vector<2x32xf32>
    %436 = vector.extract_strided_slice %392 {offsets = [0, 64], sizes = [2, 32], strides = [1, 1]} : vector<2x96xf32> to vector<2x32xf32>
    %437 = vector.extract_strided_slice %390 {offsets = [0, 64], sizes = [2, 32], strides = [1, 1]} : vector<2x96xf32> to vector<2x32xf32>
    %438 = arith.mulf %427, %437 : vector<2x32xf32>
    %439 = arith.addf %436, %438 : vector<2x32xf32>
    %440 = math.tanh %439 : vector<2x32xf32>
    %cst_128 = arith.constant 1.000000e+00 : f32
    %441 = vector.broadcast %cst_128 : f32 to vector<2x32xf32>
    %442 = arith.subf %441, %435 : vector<2x32xf32>
    %443 = arith.mulf %442, %440 : vector<2x32xf32>
    %444 = vector.extract_strided_slice %381 {offsets = [0, 32], sizes = [2, 32], strides = [1, 1]} : vector<2x64xf32> to vector<2x32xf32>
    %445 = arith.mulf %435, %444 : vector<2x32xf32>
    %446 = arith.addf %443, %445 : vector<2x32xf32>
    %c10_129 = arith.constant 10 : index
    %c0_130 = arith.constant 0 : index
    %447 = vector.load %arg22[%c10_129, %c0_130] : memref<12x32xf32, #tpu.memory_space<vmem>>, vector<2x32xf32>
    tpu.vector_store %arg22[%c10_129, %c0_130], %419 {strides = array<i32>} : memref<12x32xf32, #tpu.memory_space<vmem>>, vector<2x32xf32>,
    %c0_131 = arith.constant 0 : index
    %c0_132 = arith.constant 0 : index
    %448 = vector.load %arg23[%c0_131, %c0_132] : memref<12x32xf32, #tpu.memory_space<vmem>>, vector<2x32xf32>
    tpu.vector_store %arg23[%c0_131, %c0_132], %446 {strides = array<i32>} : memref<12x32xf32, #tpu.memory_space<vmem>>, vector<2x32xf32>,
    %c0_133 = arith.constant 0 : index
    %c0_134 = arith.constant 0 : index
    %449 = vector.load %arg22[%c0_133, %c0_134] : memref<12x32xf32, #tpu.memory_space<vmem>>, vector<12x32xf32>
    %c0_135 = arith.constant 0 : index
    %c0_136 = arith.constant 0 : index
    %450 = vector.load %arg23[%c0_135, %c0_136] : memref<12x32xf32, #tpu.memory_space<vmem>>, vector<12x32xf32>
    %451 = arith.addf %449, %450 : vector<12x32xf32>
    %cst_137 = arith.constant dense<0.000000e+00> : vector<12xf32>
    %452 = vector.multi_reduction <add>, %451, %cst_137 [1] : vector<12x32xf32> to vector<12xf32>
    %453 = vector.shape_cast %452 : vector<12xf32> to vector<12x1xf32>
    %cst_138 = arith.constant 3.200000e+01 : f32
    %454 = vector.broadcast %cst_138 : f32 to vector<12x1xf32>
    %455 = arith.divf %453, %454 : vector<12x1xf32>
    %456 = vector.broadcast %455 : vector<12x1xf32> to vector<12x32xf32>
    %457 = arith.subf %451, %456 : vector<12x32xf32>
    %458 = arith.mulf %457, %457 : vector<12x32xf32>
    %cst_139 = arith.constant dense<0.000000e+00> : vector<12xf32>
    %459 = vector.multi_reduction <add>, %458, %cst_139 [1] : vector<12x32xf32> to vector<12xf32>
    %460 = vector.shape_cast %459 : vector<12xf32> to vector<12x1xf32>
    %cst_140 = arith.constant 3.200000e+01 : f32
    %461 = vector.broadcast %cst_140 : f32 to vector<12x1xf32>
    %462 = arith.divf %460, %461 : vector<12x1xf32>
    %463 = vector.broadcast %455 : vector<12x1xf32> to vector<12x32xf32>
    %464 = arith.subf %451, %463 : vector<12x32xf32>
    %cst_141 = arith.constant 9.99999974E-6 : f32
    %465 = vector.broadcast %cst_141 : f32 to vector<12x1xf32>
    %466 = arith.addf %462, %465 : vector<12x1xf32>
    %467 = math.rsqrt %466 : vector<12x1xf32>
    %468 = vector.broadcast %467 : vector<12x1xf32> to vector<12x32xf32>
    %469 = arith.mulf %464, %468 : vector<12x32xf32>
    %c0_142 = arith.constant 0 : index
    %c0_143 = arith.constant 0 : index
    %470 = vector.load %arg9[%c0_142, %c0_143] : memref<1x32xf32, #tpu.memory_space<vmem>>, vector<1x32xf32>
    %471 = vector.broadcast %470 : vector<1x32xf32> to vector<12x32xf32>
    %472 = arith.mulf %469, %471 : vector<12x32xf32>
    %c0_144 = arith.constant 0 : index
    %c0_145 = arith.constant 0 : index
    %473 = vector.load %arg10[%c0_144, %c0_145] : memref<1x32xf32, #tpu.memory_space<vmem>>, vector<1x32xf32>
    %474 = vector.broadcast %473 : vector<1x32xf32> to vector<12x32xf32>
    %475 = arith.addf %472, %474 : vector<12x32xf32>
    %c0_146 = arith.constant 0 : index
    %c0_147 = arith.constant 0 : index
    %476 = vector.load %arg11[%c0_146, %c0_147] : memref<32x64xf32, #tpu.memory_space<vmem>>, vector<32x64xf32>
    %cst_148 = arith.constant dense<0.000000e+00> : vector<12x64xf32>
    %477 = tpu.matmul %475, %476, %cst_148 {dimension_numbers = #tpu.dot_dimension_numbers<[1], [0], [0], [1], [0, 0, 1, 1], [], []>} : vector<12x32xf32>, vector<32x64xf32>, vector<12x64xf32> -> vector<12x64xf32>
    %c0_149 = arith.constant 0 : index
    %c0_150 = arith.constant 0 : index
    %478 = vector.load %arg12[%c0_149, %c0_150] : memref<1x64xf32, #tpu.memory_space<vmem>>, vector<1x64xf32>
    %479 = vector.broadcast %478 : vector<1x64xf32> to vector<12x64xf32>
    %480 = arith.addf %477, %479 : vector<12x64xf32>
    %cst_151 = arith.constant 0.000000e+00 : f32
    %481 = vector.broadcast %cst_151 : f32 to vector<12x64xf32>
    %482 = arith.maximumf %480, %481 : vector<12x64xf32>
    %c0_152 = arith.constant 0 : index
    %c0_153 = arith.constant 0 : index
    %483 = vector.load %arg13[%c0_152, %c0_153] : memref<64x32xf32, #tpu.memory_space<vmem>>, vector<64x32xf32>
    %cst_154 = arith.constant dense<0.000000e+00> : vector<12x32xf32>
    %484 = tpu.matmul %482, %483, %cst_154 {dimension_numbers = #tpu.dot_dimension_numbers<[1], [0], [0], [1], [0, 0, 1, 1], [], []>} : vector<12x64xf32>, vector<64x32xf32>, vector<12x32xf32> -> vector<12x32xf32>
    %c0_155 = arith.constant 0 : index
    %c0_156 = arith.constant 0 : index
    %485 = vector.load %arg14[%c0_155, %c0_156] : memref<1x32xf32, #tpu.memory_space<vmem>>, vector<1x32xf32>
    %486 = vector.broadcast %485 : vector<1x32xf32> to vector<12x32xf32>
    %487 = arith.addf %484, %486 : vector<12x32xf32>
    %c0_157 = arith.constant 0 : index
    %c0_158 = arith.constant 0 : index
    %488 = vector.load %arg15[%c0_157, %c0_158] : memref<32x31xf32, #tpu.memory_space<vmem>>, vector<32x31xf32>
    %cst_159 = arith.constant dense<0.000000e+00> : vector<12x31xf32>
    %489 = tpu.matmul %487, %488, %cst_159 {dimension_numbers = #tpu.dot_dimension_numbers<[1], [0], [0], [1], [0, 0, 1, 1], [], []>} : vector<12x32xf32>, vector<32x31xf32>, vector<12x31xf32> -> vector<12x31xf32>
    %c0_160 = arith.constant 0 : index
    %c0_161 = arith.constant 0 : index
    %490 = vector.load %arg16[%c0_160, %c0_161] : memref<1x31xf32, #tpu.memory_space<vmem>>, vector<1x31xf32>
    %491 = vector.broadcast %490 : vector<1x31xf32> to vector<12x31xf32>
    %492 = arith.addf %489, %491 : vector<12x31xf32>
    %493 = vector.extract_strided_slice %492 {offsets = [0, 0], sizes = [2, 31], strides = [1, 1]} : vector<12x31xf32> to vector<2x31xf32>
    %494 = vector.extract_strided_slice %492 {offsets = [2, 0], sizes = [2, 31], strides = [1, 1]} : vector<12x31xf32> to vector<2x31xf32>
    %495 = arith.addf %493, %494 : vector<2x31xf32>
    %496 = vector.extract_strided_slice %492 {offsets = [4, 0], sizes = [2, 31], strides = [1, 1]} : vector<12x31xf32> to vector<2x31xf32>
    %497 = arith.addf %495, %496 : vector<2x31xf32>
    %498 = vector.extract_strided_slice %492 {offsets = [6, 0], sizes = [2, 31], strides = [1, 1]} : vector<12x31xf32> to vector<2x31xf32>
    %499 = arith.addf %497, %498 : vector<2x31xf32>
    %500 = vector.extract_strided_slice %492 {offsets = [8, 0], sizes = [2, 31], strides = [1, 1]} : vector<12x31xf32> to vector<2x31xf32>
    %501 = arith.addf %499, %500 : vector<2x31xf32>
    %502 = vector.extract_strided_slice %492 {offsets = [10, 0], sizes = [2, 31], strides = [1, 1]} : vector<12x31xf32> to vector<2x31xf32>
    %503 = arith.addf %501, %502 : vector<2x31xf32>
    %cst_162 = arith.constant 0.166666672 : f32
    %504 = vector.broadcast %cst_162 : f32 to vector<2x31xf32>
    %505 = arith.mulf %503, %504 : vector<2x31xf32>
    %c0_163 = arith.constant 0 : index
    %c0_164 = arith.constant 0 : index
    %506 = vector.load %arg17[%c0_163, %c0_164] : memref<31x1xf32, #tpu.memory_space<vmem>>, vector<31x1xf32>
    %cst_165 = arith.constant dense<0.000000e+00> : vector<2x1xf32>
    %507 = tpu.matmul %505, %506, %cst_165 {dimension_numbers = #tpu.dot_dimension_numbers<[1], [0], [0], [1], [0, 0, 1, 1], [], []>} : vector<2x31xf32>, vector<31x1xf32>, vector<2x1xf32> -> vector<2x1xf32>
    %c0_166 = arith.constant 0 : index
    %c0_167 = arith.constant 0 : index
    %508 = vector.load %arg18[%c0_166, %c0_167] : memref<1x1xf32, #tpu.memory_space<vmem>>, vector<1x1xf32>
    %509 = vector.broadcast %508 : vector<1x1xf32> to vector<2x1xf32>
    %510 = arith.addf %507, %509 : vector<2x1xf32>
    %511 = arith.negf %510 : vector<2x1xf32>
    %512 = math.exp %511 : vector<2x1xf32>
    %cst_168 = arith.constant 1.000000e+00 : f32
    %513 = vector.broadcast %cst_168 : f32 to vector<2x1xf32>
    %514 = arith.addf %513, %512 : vector<2x1xf32>
    %515 = arith.divf %513, %514 : vector<2x1xf32>
    %516 = vector.shape_cast %515 : vector<2x1xf32> to vector<2x1x1xf32>
    %c0_169 = arith.constant 0 : index
    %c0_170 = arith.constant 0 : index
    %c0_171 = arith.constant 0 : index
    %517 = vector.load %arg19[%c0_169, %c0_170, %c0_171] : memref<2x1x1xf32, #tpu.memory_space<vmem>>, vector<2x1x1xf32>
    tpu.vector_store %arg19[%c0_169, %c0_170, %c0_171], %516 {strides = array<i32>} : memref<2x1x1xf32, #tpu.memory_space<vmem>>, vector<2x1x1xf32>,
    return
  }
}

</mosaic_0001>

<llo_original>
// kernel: basic_model_forward.1
$region0: #{basic_model_forward.1}
  #allocation0 [shape = 'u32[]', space=smem, size = 0x4, offset = 0x4, fixed_abs, tag = 'smem constant byte address 0x4 - core index']
  #allocation1 [shape = 'u32[72,128]{1,0:T(1,128)}', space=vmem, size = 0x9000, scoped, tag = 'internal scratch']
  #allocation2 [shape = 'f32[2,20,4]{2,1,0:T(8,128)}', space=vmem, size = 0x6000, scoped, tag = 'scratch operand']
  #allocation3 [shape = 'f32[12,32]{1,0:T(8,128)}', space=vmem, size = 0x2000, scoped, tag = 'scratch operand']
  #allocation4 [shape = 'f32[12,32]{1,0:T(8,128)}', space=vmem, size = 0x2000, scoped, tag = 'scratch operand']
  #allocation5 [shape = 'f32[12,32]{1,0:T(8,128)}', space=vmem, size = 0x2000, scoped, tag = 'scratch operand']
  #allocation6 [shape = 'f32[1,1]{1,0:T(1,128)S(1)}', space=vmem, size = 0x200, scoped, tag = 'scoped memory for basic_model_forward.1']
  %s0 = inlined_call_operand.vmem [shape: f32[2,16,4], index: 0, kind: input, shape index: {}]
  %s1 = inlined_call_operand.vmem [shape: f32[20,32], index: 1, kind: input, shape index: {}]
  %s2 = inlined_call_operand.vmem [shape: f32[1,32], index: 2, kind: input, shape index: {}]
  %s3 = inlined_call_operand.vmem [shape: f32[32,96], index: 3, kind: input, shape index: {}]
  %s4 = inlined_call_operand.vmem [shape: f32[1,96], index: 4, kind: input, shape index: {}]
  %s5 = inlined_call_operand.vmem [shape: f32[32,96], index: 5, kind: input, shape index: {}]
  %s6 = inlined_call_operand.vmem [shape: f32[1,96], index: 6, kind: input, shape index: {}]
  %s7 = inlined_call_operand.vmem [shape: f32[64,192], index: 7, kind: input, shape index: {}]
  %s8 = inlined_call_operand.vmem [shape: f32[1,192], index: 8, kind: input, shape index: {}]
  %s9 = inlined_call_operand.vmem [shape: f32[1,32], index: 9, kind: input, shape index: {}]
  %s10 = inlined_call_operand.vmem [shape: f32[1,32], index: 10, kind: input, shape index: {}]
  %s11 = inlined_call_operand.vmem [shape: f32[32,64], index: 11, kind: input, shape index: {}]
  %s12 = inlined_call_operand.vmem [shape: f32[1,64], index: 12, kind: input, shape index: {}]
  %s13 = inlined_call_operand.vmem [shape: f32[64,32], index: 13, kind: input, shape index: {}]
  %s14 = inlined_call_operand.vmem [shape: f32[1,32], index: 14, kind: input, shape index: {}]
  %s15 = inlined_call_operand.vmem [shape: f32[32,31], index: 15, kind: input, shape index: {}]
  %s16 = inlined_call_operand.vmem [shape: f32[1,31], index: 16, kind: input, shape index: {}]
  %s17 = inlined_call_operand.vmem [shape: f32[31,1], index: 17, kind: input, shape index: {}]
  %s18 = inlined_call_operand.<no memory space> [shape: f32[1,1], index: 18, kind: input, shape index: {}]
  %s19 = inlined_call_operand.vmem [shape: f32[2,1,1], index: 19, kind: output, shape index: {}]
  %s20 = sld [smem:[#allocation0]]
  $region86: #{basic_model_forward.1} parent=0
    _
  %s22 = ssub.s32 1, %s20
  %s23 = scalar_select 0, %s22, %s20
  %v24 = vstv %s18
  %25 = vst [vmem:[#allocation6] sm:$0x1] %v24
  // Predicated region
  $region2: #{basic_model_forward.1} parent=0 // pred_check
    _
  $region3: #{basic_model_forward.1} parent=0 // pred_check_branch
    %27 = sbr.rel (0) target = $region5
  $region4: #{basic_model_forward.1} parent=0 // pred_region
    _
  $region5: #{basic_model_forward.1} parent=0 // pred_fallthru
    _
  // Predicated region
  $region6: #{basic_model_forward.1} parent=0 // pred_check
    _
  $region7: #{basic_model_forward.1} parent=0 // pred_check_branch
    %29 = sbr.rel (0) target = $region9
  $region8: #{basic_model_forward.1} parent=0 // pred_region
    _
  $region9: #{basic_model_forward.1} parent=0 // pred_fallthru
    _
  // Predicated region
  $region10: #{basic_model_forward.1} parent=0 // pred_check
    _
  $region11: #{basic_model_forward.1} parent=0 // pred_check_branch
    %31 = sbr.rel (0) target = $region13
  $region12: #{basic_model_forward.1} parent=0 // pred_region
    _
  $region13: #{basic_model_forward.1} parent=0 // pred_fallthru
    _
  // Predicated region
  $region14: #{basic_model_forward.1} parent=0 // pred_check
    _
  $region15: #{basic_model_forward.1} parent=0 // pred_check_branch
    %33 = sbr.rel (0) target = $region17
  $region16: #{basic_model_forward.1} parent=0 // pred_region
    _
  $region17: #{basic_model_forward.1} parent=0 // pred_fallthru
    _
  // Predicated region
  $region18: #{basic_model_forward.1} parent=0 // pred_check
    _
  $region19: #{basic_model_forward.1} parent=0 // pred_check_branch
    %35 = sbr.rel (0) target = $region21
  $region20: #{basic_model_forward.1} parent=0 // pred_region
    _
  $region21: #{basic_model_forward.1} parent=0 // pred_fallthru
    _
  // Predicated region
  $region22: #{basic_model_forward.1} parent=0 // pred_check
    _
  $region23: #{basic_model_forward.1} parent=0 // pred_check_branch
    %37 = sbr.rel (0) target = $region25
  $region24: #{basic_model_forward.1} parent=0 // pred_region
    _
  $region25: #{basic_model_forward.1} parent=0 // pred_fallthru
    _
  // Predicated region
  $region26: #{basic_model_forward.1} parent=0 // pred_check
    _
  $region27: #{basic_model_forward.1} parent=0 // pred_check_branch
    %39 = sbr.rel (0) target = $region29
  $region28: #{basic_model_forward.1} parent=0 // pred_region
    _
  $region29: #{basic_model_forward.1} parent=0 // pred_fallthru
    _
  // Predicated region
  $region30: #{basic_model_forward.1} parent=0 // pred_check
    _
  $region31: #{basic_model_forward.1} parent=0 // pred_check_branch
    %41 = sbr.rel (0) target = $region33
  $region32: #{basic_model_forward.1} parent=0 // pred_region
    _
  $region33: #{basic_model_forward.1} parent=0 // pred_fallthru
    _
  // Predicated region
  $region34: #{basic_model_forward.1} parent=0 // pred_check
    _
  $region35: #{basic_model_forward.1} parent=0 // pred_check_branch
    %43 = sbr.rel (0) target = $region37
  $region36: #{basic_model_forward.1} parent=0 // pred_region
    _
  $region37: #{basic_model_forward.1} parent=0 // pred_fallthru
    _
  // Predicated region
  $region38: #{basic_model_forward.1} parent=0 // pred_check
    _
  $region39: #{basic_model_forward.1} parent=0 // pred_check_branch
    %45 = sbr.rel (0) target = $region41
  $region40: #{basic_model_forward.1} parent=0 // pred_region
    _
  $region41: #{basic_model_forward.1} parent=0 // pred_fallthru
    _
  // Predicated region
  $region42: #{basic_model_forward.1} parent=0 // pred_check
    _
  $region43: #{basic_model_forward.1} parent=0 // pred_check_branch
    %47 = sbr.rel (0) target = $region45
  $region44: #{basic_model_forward.1} parent=0 // pred_region
    _
  $region45: #{basic_model_forward.1} parent=0 // pred_fallthru
    _
  // Predicated region
  $region46: #{basic_model_forward.1} parent=0 // pred_check
    _
  $region47: #{basic_model_forward.1} parent=0 // pred_check_branch
    %49 = sbr.rel (0) target = $region49
  $region48: #{basic_model_forward.1} parent=0 // pred_region
    _
  $region49: #{basic_model_forward.1} parent=0 // pred_fallthru
    _
  // Predicated region
  $region50: #{basic_model_forward.1} parent=0 // pred_check
    _
  $region51: #{basic_model_forward.1} parent=0 // pred_check_branch
    %51 = sbr.rel (0) target = $region53
  $region52: #{basic_model_forward.1} parent=0 // pred_region
    _
  $region53: #{basic_model_forward.1} parent=0 // pred_fallthru
    _
  // Predicated region
  $region54: #{basic_model_forward.1} parent=0 // pred_check
    _
  $region55: #{basic_model_forward.1} parent=0 // pred_check_branch
    %53 = sbr.rel (0) target = $region57
  $region56: #{basic_model_forward.1} parent=0 // pred_region
    _
  $region57: #{basic_model_forward.1} parent=0 // pred_fallthru
    _
  // Predicated region
  $region58: #{basic_model_forward.1} parent=0 // pred_check
    _
  $region59: #{basic_model_forward.1} parent=0 // pred_check_branch
    %55 = sbr.rel (0) target = $region61
  $region60: #{basic_model_forward.1} parent=0 // pred_region
    _
  $region61: #{basic_model_forward.1} parent=0 // pred_fallthru
    _
  // Predicated region
  $region62: #{basic_model_forward.1} parent=0 // pred_check
    _
  $region63: #{basic_model_forward.1} parent=0 // pred_check_branch
    %57 = sbr.rel (0) target = $region65
  $region64: #{basic_model_forward.1} parent=0 // pred_region
    _
  $region65: #{basic_model_forward.1} parent=0 // pred_fallthru
    _
  // Predicated region
  $region66: #{basic_model_forward.1} parent=0 // pred_check
    _
  $region67: #{basic_model_forward.1} parent=0 // pred_check_branch
    %59 = sbr.rel (0) target = $region69
  $region68: #{basic_model_forward.1} parent=0 // pred_region
    _
  $region69: #{basic_model_forward.1} parent=0 // pred_fallthru
    _
  // Predicated region
  $region70: #{basic_model_forward.1} parent=0 // pred_check
    _
  $region71: #{basic_model_forward.1} parent=0 // pred_check_branch
    %61 = sbr.rel (0) target = $region73
  $region72: #{basic_model_forward.1} parent=0 // pred_region
    _
  $region73: #{basic_model_forward.1} parent=0 // pred_fallthru
    _
  // Predicated region
  $region74: #{basic_model_forward.1} parent=0 // pred_check
    _
  $region75: #{basic_model_forward.1} parent=0 // pred_check_branch
    %63 = sbr.rel (0) target = $region77
  $region76: #{basic_model_forward.1} parent=0 // pred_region
    _
  $region77: #{basic_model_forward.1} parent=0 // pred_fallthru
    _
  %vm64 = vcmask 31744
  %65 = vst.msk [vmem:[#allocation2] sm:$0xff] %vm64, 0.0
  %66 = vst.msk [vmem:[#allocation2 + $0x8] sm:$0xff] %vm64, 0.0
  %vm67 = vcmask 27648
  %68 = vst.msk [vmem:[#allocation2 + $0x10] sm:$0xf] %vm67, 0.0
  %69 = vst.msk [vmem:[#allocation2 + $0x18] sm:$0xff] %vm64, 0.0
  %70 = vst.msk [vmem:[#allocation2 + $0x20] sm:$0xff] %vm64, 0.0
  %71 = vst.msk [vmem:[#allocation2 + $0x28] sm:$0xf] %vm67, 0.0
  %v72 = vld [vmem:[%s0] sm:$0xff]
  %v73 = vld [vmem:[%s0 + $0x8] sm:$0xff]
  %v74 = vld [vmem:[%s0 + $0x10] sm:$0xff]
  %v75 = vld [vmem:[%s0 + $0x18] sm:$0xff]
  %76 = vst.msk [vmem:[#allocation2 + $0x2] sm:$0xff] %vm64, %v72
  %77 = vst.msk [vmem:[#allocation2 + $0xa] sm:$0xff] %vm64, %v73
  %78 = vst.msk [vmem:[#allocation2 + $0x1a] sm:$0xff] %vm64, %v74
  %79 = vst.msk [vmem:[#allocation2 + $0x22] sm:$0xff] %vm64, %v75
  %v80 = vld [vmem:[#allocation2] sm:$0xff]
  %v81 = vld [vmem:[#allocation2 + $0x8] sm:$0xff]
  %v82 = vld [vmem:[#allocation2 + $0x10] sm:$0xf]
  %v83 = vld [vmem:[#allocation2 + $0x18] sm:$0xff]
  %v84 = vld [vmem:[#allocation2 + $0x20] sm:$0xff]
  %v85 = vld [vmem:[#allocation2 + $0x28] sm:$0xf]
  %vm92 = vcmask 1046528
  %v93 = vrot.slane %v80, 1
  %v94 = vrot.slane %v81, 1
  %v95 = vsel %vm92, %v93, %v94
  %v96 = vrot.slane %v82, 1
  %v97 = vsel %vm92, %v94, %v96
  %v98 = vrot.slane %v83, 1
  %v99 = vrot.slane %v84, 1
  %v100 = vsel %vm92, %v98, %v99
  %v101 = vrot.slane %v85, 1
  %v102 = vsel %vm92, %v99, %v101
  %vm103 = vcmask 1045504
  %v104 = vrot.slane %v80, 2
  %v105 = vrot.slane %v81, 2
  %v106 = vsel %vm103, %v104, %v105
  %v107 = vrot.slane %v82, 2
  %v108 = vsel %vm103, %v105, %v107
  %v109 = vrot.slane %v83, 2
  %v110 = vrot.slane %v84, 2
  %v111 = vsel %vm103, %v109, %v110
  %v112 = vrot.slane %v85, 2
  %v113 = vsel %vm103, %v110, %v112
  %vm114 = vcmask 1044480
  %v115 = vrot.slane %v80, 3
  %v116 = vrot.slane %v81, 3
  %v117 = vsel %vm114, %v115, %v116
  %v118 = vrot.slane %v82, 3
  %v119 = vsel %vm114, %v116, %v118
  %v120 = vrot.slane %v83, 3
  %v121 = vrot.slane %v84, 3
  %v122 = vsel %vm114, %v120, %v121
  %v123 = vrot.slane %v85, 3
  %v124 = vsel %vm114, %v121, %v123
  %vm125 = vcmask 1043456
  %v126 = vrot.slane %v80, 4
  %v127 = vrot.slane %v81, 4
  %v128 = vsel %vm125, %v126, %v127
  %v129 = vrot.slane %v82, 4
  %v130 = vsel %vm125, %v127, %v129
  %v131 = vrot.slane %v83, 4
  %v132 = vrot.slane %v84, 4
  %v133 = vsel %vm125, %v131, %v132
  %v134 = vrot.slane %v85, 4
  %v135 = vsel %vm125, %v132, %v134
  %136 = vrot.lane.b32.xlu0 %v95, 4
  %v137 = vpop.permute.xlu0 %136
  %138 = vrot.lane.b32.xlu0 %v97, 4
  %v139 = vpop.permute.xlu0 %138
  %140 = vrot.lane.b32.xlu0 %v100, 4
  %v141 = vpop.permute.xlu0 %140
  %142 = vrot.lane.b32.xlu0 %v102, 4
  %v143 = vpop.permute.xlu0 %142
  %148 = vrot.lane.b32.xlu0 %v106, 8
  %v149 = vpop.permute.xlu0 %148
  %150 = vrot.lane.b32.xlu0 %v108, 8
  %v151 = vpop.permute.xlu0 %150
  %152 = vrot.lane.b32.xlu0 %v111, 8
  %v153 = vpop.permute.xlu0 %152
  %154 = vrot.lane.b32.xlu0 %v113, 8
  %v155 = vpop.permute.xlu0 %154
  %160 = vrot.lane.b32.xlu0 %v117, 12
  %v161 = vpop.permute.xlu0 %160
  %162 = vrot.lane.b32.xlu0 %v119, 12
  %v163 = vpop.permute.xlu0 %162
  %164 = vrot.lane.b32.xlu0 %v122, 12
  %v165 = vpop.permute.xlu0 %164
  %166 = vrot.lane.b32.xlu0 %v124, 12
  %v167 = vpop.permute.xlu0 %166
  %172 = vrot.lane.b32.xlu0 %v128, 16
  %v173 = vpop.permute.xlu0 %172
  %174 = vrot.lane.b32.xlu0 %v130, 16
  %v175 = vpop.permute.xlu0 %174
  %176 = vrot.lane.b32.xlu0 %v133, 16
  %v177 = vpop.permute.xlu0 %176
  %178 = vrot.lane.b32.xlu0 %v135, 16
  %v179 = vpop.permute.xlu0 %178
  %v184 = vsel %vm64, %v80, %v137
  %v185 = vsel %vm64, %v81, %v139
  %v186 = vsel %vm64, %v83, %v141
  %v187 = vsel %vm64, %v84, %v143
  %vm188 = vcmask 64512
  %v189 = vsel %vm188, %v184, %v149
  %v190 = vsel %vm188, %v185, %v151
  %v191 = vsel %vm188, %v186, %v153
  %v192 = vsel %vm188, %v187, %v155
  %vm193 = vcmask 97280
  %v194 = vsel %vm193, %v189, %v161
  %v195 = vsel %vm193, %v190, %v163
  %v196 = vsel %vm193, %v191, %v165
  %v197 = vsel %vm193, %v192, %v167
  %vm198 = vcmask 130048
  %v199 = vsel %vm198, %v194, %v173
  %v200 = vsel %vm198, %v195, %v175
  %v201 = vsel %vm198, %v196, %v177
  %v202 = vsel %vm198, %v197, %v179
  %v203 = vld [vmem:[%s1] sm:$0xff]
  %v204 = vld [vmem:[%s1 + $0x8] sm:$0xff]
  %v205 = vld [vmem:[%s1 + $0x10] sm:$0xf]
  %v206 = vld [vmem:[%s2] sm:$0x1]
  %v208 = vperm.slane %v206, 0
  %vm210 = vcmask 162816
  %v212 = vsel %vm210, %v199, 0
  %v215 = vsel %vm210, %v200, 0
  %v218 = vsel %vm210, %v201, 0
  %v221 = vsel %vm210, %v202, 0
  %v224 = vsel %vm125, %v205, 0
  %226 = vmatpush.msra.mxu0 0.0
  %227 = vmatpush.msra.mxu0 0.0
  %228 = vmatpush.msra.mxu0 0.0
  %229 = vmatpush.msra.mxu0 0.0
  %230 = vmatpush.msra.mxu0 0.0
  %231 = vmatpush.msra.mxu0 0.0
  %232 = vmatpush.msra.mxu0 0.0
  %233 = vmatpush.msra.mxu0 0.0
  %234 = vmatpush.msra.mxu0 0.0
  %235 = vmatpush.msra.mxu0 0.0
  %236 = vmatpush.msra.mxu0 0.0
  %237 = vmatpush.msra.mxu0 0.0
  %238 = vmatpush.msra.mxu0 0.0
  %239 = vmatpush.msra.mxu0 %v224
  %240 = vmatpush.msra.mxu0 %v204
  %241 = vmatpush.msra.mxu0 %v203
  %242 = vmatmul.f32.gmra.mxu0 %v212
  %v243 = vpop.f32.mrf.mxu0
  %v244 = vadd.f32 %v208, %v243
  %245 = vmatmul.f32.gmra.mxu0 %v215
  %v246 = vpop.f32.mrf.mxu0
  %v247 = vadd.f32 %v208, %v246
  %248 = vmatmul.f32.gmra.mxu0 %v218
  %v249 = vpop.f32.mrf.mxu0
  %v250 = vadd.f32 %v208, %v249
  %251 = vmatmul.f32.gmra.mxu0 %v221
  %v252 = vpop.f32.mrf.mxu0
  %v253 = vadd.f32 %v208, %v252
  %254 = vdwg.mxu0
  %v255 = vmax.f32 %v244, 0.0
  %v256 = vmax.f32 %v247, 0.0
  %v257 = vmax.f32 %v250, 0.0
  %v258 = vmax.f32 %v253, 0.0
  %vm259 = vcmask 254976
  %v260 = vsel %vm259, %v255, -inf
  %v261 = vrot.slane %v260, 4
  %v262 = vmax.f32 %v260, %v261
  %v263 = vrot.slane %v262, 2
  %v264 = vmax.f32 %v262, %v263
  %v265 = vrot.slane %v264, 1
  %v266 = vmax.f32 %v264, %v265
  %v267 = vsel %vm259, %v257, -inf
  %v268 = vrot.slane %v267, 4
  %v269 = vmax.f32 %v267, %v268
  %v270 = vrot.slane %v269, 2
  %v271 = vmax.f32 %v269, %v270
  %v272 = vrot.slane %v271, 1
  %v273 = vmax.f32 %v271, %v272
  %vm276 = vcmask 1041409
  %v277 = vsel %vm276, %v273, %v266
  %279 = vst.msk [vmem:[#allocation3] sm:$0x3] %vm259, %v277
  %vm280 = vcmask 258050
  %v281 = vsel %vm280, %v255, -inf
  %v282 = vrot.slane %v281, 4
  %v283 = vmax.f32 %v281, %v282
  %v284 = vrot.slane %v283, 2
  %v285 = vmax.f32 %v283, %v284
  %v286 = vrot.slane %v285, 1
  %v287 = vmax.f32 %v285, %v286
  %v288 = vsel %vm280, %v257, -inf
  %v289 = vrot.slane %v288, 4
  %v290 = vmax.f32 %v288, %v289
  %v291 = vrot.slane %v290, 2
  %v292 = vmax.f32 %v290, %v291
  %v293 = vrot.slane %v292, 1
  %v294 = vmax.f32 %v292, %v293
  %v297 = vsel %vm276, %v294, %v287
  %299 = vst.msk [vmem:[#allocation3 + $0x2] sm:$0x3] %vm259, %v297
  %vm300 = vcmask 261125
  %v301 = vsel %vm300, %v255, -inf
  %v302 = vrot.slane %v301, 4
  %v303 = vmax.f32 %v301, %v302
  %v304 = vrot.slane %v303, 2
  %v305 = vmax.f32 %v303, %v304
  %v306 = vrot.slane %v305, 1
  %v307 = vmax.f32 %v305, %v306
  %v308 = vsel %vm300, %v257, -inf
  %v309 = vrot.slane %v308, 4
  %v310 = vmax.f32 %v308, %v309
  %v311 = vrot.slane %v310, 2
  %v312 = vmax.f32 %v310, %v311
  %v313 = vrot.slane %v312, 1
  %v314 = vmax.f32 %v312, %v313
  %v317 = vsel %vm276, %v314, %v307
  %319 = vst.msk [vmem:[#allocation3 + $0x4] sm:$0x3] %vm259, %v317
  %vm320 = vcmask 256000
  %v321 = vsel %vm320, %v256, -inf
  %v322 = vrot.slane %v321, 4
  %v323 = vmax.f32 %v321, %v322
  %v324 = vrot.slane %v323, 2
  %v325 = vmax.f32 %v323, %v324
  %v326 = vrot.slane %v325, 1
  %v327 = vmax.f32 %v325, %v326
  %v328 = vsel %vm320, %v258, -inf
  %v329 = vrot.slane %v328, 4
  %v330 = vmax.f32 %v328, %v329
  %v331 = vrot.slane %v330, 2
  %v332 = vmax.f32 %v330, %v331
  %v333 = vrot.slane %v332, 1
  %v334 = vmax.f32 %v332, %v333
  %v337 = vsel %vm276, %v334, %v327
  %339 = vst.msk [vmem:[#allocation3 + $0x6] sm:$0x3] %vm259, %v337
  %vm340 = vcmask 259075
  %v341 = vsel %vm340, %v256, -inf
  %v342 = vrot.slane %v341, 4
  %v343 = vmax.f32 %v341, %v342
  %v344 = vrot.slane %v343, 2
  %v345 = vmax.f32 %v343, %v344
  %v346 = vrot.slane %v345, 1
  %v347 = vmax.f32 %v345, %v346
  %v348 = vsel %vm340, %v258, -inf
  %v349 = vrot.slane %v348, 4
  %v350 = vmax.f32 %v348, %v349
  %v351 = vrot.slane %v350, 2
  %v352 = vmax.f32 %v350, %v351
  %v353 = vrot.slane %v352, 1
  %v354 = vmax.f32 %v352, %v353
  %v357 = vsel %vm276, %v354, %v347
  %359 = vst.msk [vmem:[#allocation3 + $0x8] sm:$0x3] %vm259, %v357
  %vm360 = vcmask 261126
  %v361 = vsel %vm360, %v256, -inf
  %v362 = vrot.slane %v361, 4
  %v363 = vmax.f32 %v361, %v362
  %v364 = vrot.slane %v363, 2
  %v365 = vmax.f32 %v363, %v364
  %v366 = vrot.slane %v365, 1
  %v367 = vmax.f32 %v365, %v366
  %v368 = vsel %vm360, %v258, -inf
  %v369 = vrot.slane %v368, 4
  %v370 = vmax.f32 %v368, %v369
  %v371 = vrot.slane %v370, 2
  %v372 = vmax.f32 %v370, %v371
  %v373 = vrot.slane %v372, 1
  %v374 = vmax.f32 %v372, %v373
  %v377 = vsel %vm276, %v374, %v367
  %379 = vst.msk [vmem:[#allocation3 + $0xa] sm:$0x3] %vm259, %v377
  %v380 = vld [vmem:[#allocation3] sm:$0xff]
  %v381 = vld [vmem:[#allocation3 + $0x8] sm:$0xf]
  %v382 = vld [vmem:[%s3] sm:$0xff]
  %v383 = vld [vmem:[%s3 + $0x8] sm:$0xff]
  %v384 = vld [vmem:[%s3 + $0x10] sm:$0xff]
  %v385 = vld [vmem:[%s3 + $0x18] sm:$0xff]
  %v386 = vld [vmem:[%s4] sm:$0x1]
  %v388 = vperm.slane %v386, 0
  %vm390 = vcmask 261120
  %v392 = vsel %vm390, %v380, 0
  %v395 = vsel %vm390, %v381, 0
  %397 = vmatpush.msra.mxu0 0.0
  %398 = vmatpush.msra.mxu0 0.0
  %399 = vmatpush.msra.mxu0 0.0
  %400 = vmatpush.msra.mxu0 0.0
  %401 = vmatpush.msra.mxu0 0.0
  %402 = vmatpush.msra.mxu0 0.0
  %403 = vmatpush.msra.mxu0 0.0
  %404 = vmatpush.msra.mxu0 0.0
  %405 = vmatpush.msra.mxu0 0.0
  %406 = vmatpush.msra.mxu0 0.0
  %407 = vmatpush.msra.mxu0 0.0
  %408 = vmatpush.msra.mxu0 0.0
  %409 = vmatpush.msra.mxu0 %v385
  %410 = vmatpush.msra.mxu0 %v384
  %411 = vmatpush.msra.mxu0 %v383
  %412 = vmatpush.msra.mxu0 %v382
  %413 = vmatmul.f32.gmra.mxu0 %v392
  %v414 = vpop.f32.mrf.mxu0
  %v415 = vadd.f32 %v388, %v414
  %416 = vmatmul.f32.gmra.mxu0 %v395
  %v417 = vpop.f32.mrf.mxu0
  %v418 = vadd.f32 %v388, %v417
  %419 = vdwg.mxu0
  %v420 = vld [vmem:[%s5] sm:$0xff]
  %v421 = vld [vmem:[%s5 + $0x8] sm:$0xff]
  %v422 = vld [vmem:[%s5 + $0x10] sm:$0xff]
  %v423 = vld [vmem:[%s5 + $0x18] sm:$0xff]
  %v424 = vld [vmem:[%s6] sm:$0x1]
  %v426 = vperm.slane %v424, 0
  %428 = vmatpush.msra.mxu0 0.0
  %429 = vmatpush.msra.mxu0 0.0
  %430 = vmatpush.msra.mxu0 0.0
  %431 = vmatpush.msra.mxu0 0.0
  %432 = vmatpush.msra.mxu0 0.0
  %433 = vmatpush.msra.mxu0 0.0
  %434 = vmatpush.msra.mxu0 0.0
  %435 = vmatpush.msra.mxu0 0.0
  %436 = vmatpush.msra.mxu0 0.0
  %437 = vmatpush.msra.mxu0 0.0
  %438 = vmatpush.msra.mxu0 0.0
  %439 = vmatpush.msra.mxu0 0.0
  %440 = vmatpush.msra.mxu0 %v423
  %441 = vmatpush.msra.mxu0 %v422
  %442 = vmatpush.msra.mxu0 %v421
  %443 = vmatpush.msra.mxu0 %v420
  %444 = vmatmul.f32.gmra.mxu0 %v392
  %v445 = vpop.f32.mrf.mxu0
  %v446 = vadd.f32 %v426, %v445
  %447 = vmatmul.f32.gmra.mxu0 %v395
  %v448 = vpop.f32.mrf.mxu0
  %v449 = vadd.f32 %v426, %v448
  %450 = vdwg.mxu0
  %v451 = vld [vmem:[%s7] sm:$0xff]
  %v452 = vld [vmem:[%s7 + $0x8] sm:$0xff]
  %v453 = vld [vmem:[%s7 + $0x10] sm:$0xff]
  %v454 = vld [vmem:[%s7 + $0x18] sm:$0xff]
  %v455 = vld [vmem:[%s7 + $0x20] sm:$0xff]
  %v456 = vld [vmem:[%s7 + $0x28] sm:$0xff]
  %v457 = vld [vmem:[%s7 + $0x30] sm:$0xff]
  %v458 = vld [vmem:[%s7 + $0x38] sm:$0xff]
  %v459 = vld [vmem:[%s7 + $0x40] sm:$0xff]
  %v460 = vld [vmem:[%s7 + $0x48] sm:$0xff]
  %v461 = vld [vmem:[%s7 + $0x50] sm:$0xff]
  %v462 = vld [vmem:[%s7 + $0x58] sm:$0xff]
  %v463 = vld [vmem:[%s7 + $0x60] sm:$0xff]
  %v464 = vld [vmem:[%s7 + $0x68] sm:$0xff]
  %v465 = vld [vmem:[%s7 + $0x70] sm:$0xff]
  %v466 = vld [vmem:[%s7 + $0x78] sm:$0xff]
  %v467 = vld [vmem:[%s8] sm:$0x3]
  %v469 = vperm.slane %v467, 0
  %v470 = vperm.slane %v467, 1
  %vm473 = vcmask 523264
  %v475 = vsel %vm473, 0.0, 0
  %477 = vmatpush.msra.mxu0 0.0
  %478 = vmatpush.msra.mxu0 0.0
  %479 = vmatpush.msra.mxu0 0.0
  %480 = vmatpush.msra.mxu0 0.0
  %481 = vmatpush.msra.mxu0 0.0
  %482 = vmatpush.msra.mxu0 0.0
  %483 = vmatpush.msra.mxu0 0.0
  %484 = vmatpush.msra.mxu0 0.0
  %485 = vmatpush.msra.mxu0 %v465
  %486 = vmatpush.msra.mxu0 %v463
  %487 = vmatpush.msra.mxu0 %v461
  %488 = vmatpush.msra.mxu0 %v459
  %489 = vmatpush.msra.mxu0 %v457
  %490 = vmatpush.msra.mxu0 %v455
  %491 = vmatpush.msra.mxu0 %v453
  %492 = vmatpush.msra.mxu0 %v451
  %493 = vmatmul.f32.gmra.mxu0 %v475
  %v494 = vpop.f32.mrf.mxu0
  %v495 = vadd.f32 %v469, %v494
  %496 = vdwg.mxu0
  %497 = vmatpush.msra.mxu0 0.0
  %498 = vmatpush.msra.mxu0 0.0
  %499 = vmatpush.msra.mxu0 0.0
  %500 = vmatpush.msra.mxu0 0.0
  %501 = vmatpush.msra.mxu0 0.0
  %502 = vmatpush.msra.mxu0 0.0
  %503 = vmatpush.msra.mxu0 0.0
  %504 = vmatpush.msra.mxu0 0.0
  %505 = vmatpush.msra.mxu0 %v466
  %506 = vmatpush.msra.mxu0 %v464
  %507 = vmatpush.msra.mxu0 %v462
  %508 = vmatpush.msra.mxu0 %v460
  %509 = vmatpush.msra.mxu0 %v458
  %510 = vmatpush.msra.mxu0 %v456
  %511 = vmatpush.msra.mxu0 %v454
  %512 = vmatpush.msra.mxu0 %v452
  %513 = vmatmul.f32.gmra.mxu0 %v475
  %v514 = vpop.f32.mrf.mxu0
  %v515 = vadd.f32 %v470, %v514
  %516 = vdwg.mxu0
  %v517 = vadd.f32 %v415, %v495
  %v518 = vxor.u32 %v517, 2147483648
  %v519 = vmul.f32 %v518, 1.442695
  %v520 = vpow.pop %v519
  %v521 = vadd.f32 %v520, 1.0
  %v522 = vrcp.pop %v521
  %v523 = vmul.f32 %v521, %v522
  %v524 = vsub.f32 1.0, %v523
  %v525 = vmul.f32 %v522, %v524
  %v526 = vadd.f32 %v522, %v525
  %vm527 = vweird.f32 %v521
  %vm528 = vweird.f32 %v522
  %vm529 = vmor %vm527, %vm528
  %v530 = vsel %vm529, %v522, %v526
  %v531 = vand.u32 2147483647, %v521
  %vm532 = vcmp.eq.f32.partialorder %v531, 8.507059e+37
  %v533 = vand.u32 %v521, 2147483648
  %v534 = vor.u32 1.1754944e-38, %v533
  %v535 = vsel %vm532, %v534, %v530
  %v536 = vmul.f32 1.0, %v535
  %538 = vrot.lane.b32.xlu0 %v495, 64
  %v539 = vpop.permute.xlu0 %538
  %v541 = vmul.f32 %v536, %v539
  %543 = vrot.lane.b32.xlu0 %v541, 64
  %v544 = vpop.permute.xlu0 %543
  %v546 = vadd.f32 %v415, %v544
  %v547 = vtanh.pop %v546
  %v548 = vsub.f32 1.0, %v536
  %550 = vrot.lane.b32.xlu0 %v547, 96
  %v551 = vpop.permute.xlu0 %550
  %v553 = vmul.f32 %v548, %v551
  %v554 = vmul.f32 %v536, 0.0
  %v555 = vadd.f32 %v553, %v554
  %v556 = vrot.slane %v495, 6
  %557 = vrot.lane.b32.xlu0 %v556, 32
  %v558 = vpop.permute.xlu0 %557
  %v560 = vadd.f32 %v449, %v558
  %v561 = vxor.u32 %v560, 2147483648
  %v562 = vmul.f32 %v561, 1.442695
  %v563 = vpow.pop %v562
  %v564 = vadd.f32 %v563, 1.0
  %v565 = vrcp.pop %v564
  %v566 = vmul.f32 %v564, %v565
  %v567 = vsub.f32 1.0, %v566
  %v568 = vmul.f32 %v565, %v567
  %v569 = vadd.f32 %v565, %v568
  %vm570 = vweird.f32 %v564
  %vm571 = vweird.f32 %v565
  %vm572 = vmor %vm570, %vm571
  %v573 = vsel %vm572, %v565, %v569
  %v574 = vand.u32 2147483647, %v564
  %vm575 = vcmp.eq.f32.partialorder %v574, 8.507059e+37
  %v576 = vand.u32 %v564, 2147483648
  %v577 = vor.u32 1.1754944e-38, %v576
  %v578 = vsel %vm575, %v577, %v573
  %v579 = vmul.f32 1.0, %v578
  %v581 = vrot.slane %v515, 6
  %582 = vrot.lane.b32.xlu0 %v581, 32
  %v583 = vpop.permute.xlu0 %582
  %v585 = vadd.f32 %v449, %v583
  %v586 = vxor.u32 %v585, 2147483648
  %v587 = vmul.f32 %v586, 1.442695
  %v588 = vpow.pop %v587
  %v589 = vadd.f32 %v588, 1.0
  %v590 = vrcp.pop %v589
  %v591 = vmul.f32 %v589, %v590
  %v592 = vsub.f32 1.0, %v591
  %v593 = vmul.f32 %v590, %v592
  %v594 = vadd.f32 %v590, %v593
  %vm595 = vweird.f32 %v589
  %vm596 = vweird.f32 %v590
  %vm597 = vmor %vm595, %vm596
  %v598 = vsel %vm597, %v590, %v594
  %v599 = vand.u32 2147483647, %v589
  %vm600 = vcmp.eq.f32.partialorder %v599, 8.507059e+37
  %v601 = vand.u32 %v589, 2147483648
  %v602 = vor.u32 1.1754944e-38, %v601
  %v603 = vsel %vm600, %v602, %v598
  %v604 = vmul.f32 1.0, %v603
  %605 = vrot.lane.b32.xlu0 %v581, 96
  %v606 = vpop.permute.xlu0 %605
  %v608 = vmul.f32 %v579, %v606
  %610 = vrot.lane.b32.xlu0 %v608, 64
  %v611 = vpop.permute.xlu0 %610
  %v613 = vadd.f32 %v449, %v611
  %v614 = vtanh.pop %v613
  %v615 = vsub.f32 1.0, %v604
  %617 = vrot.lane.b32.xlu0 %v614, 96
  %v618 = vpop.permute.xlu0 %617
  %v620 = vmul.f32 %v615, %v618
  %v621 = vmul.f32 %v604, 0.0
  %v622 = vadd.f32 %v620, %v621
  %624 = vrot.lane.b32.xlu0 %v555, 96
  %v625 = vpop.permute.xlu0 %624
  %v628 = vrot.slane %v622, 2
  %v630 = vsel %vm390, %v625, %v628
  %631 = vst.msk [vmem:[#allocation4] sm:$0x3] %vm259, %v625
  %632 = vrot.lane.b32.xlu0 %v622, 96
  %v633 = vpop.permute.xlu0 %632
  %vm635 = vcmask 257026
  %636 = vst.msk [vmem:[#allocation5 + $0x8] sm:$0xc] %vm635, %v633
  %v637 = vld [vmem:[%s7] sm:$0xff]
  %v638 = vld [vmem:[%s7 + $0x8] sm:$0xff]
  %v639 = vld [vmem:[%s7 + $0x10] sm:$0xff]
  %v640 = vld [vmem:[%s7 + $0x18] sm:$0xff]
  %v641 = vld [vmem:[%s7 + $0x20] sm:$0xff]
  %v642 = vld [vmem:[%s7 + $0x28] sm:$0xff]
  %v643 = vld [vmem:[%s7 + $0x30] sm:$0xff]
  %v644 = vld [vmem:[%s7 + $0x38] sm:$0xff]
  %v645 = vld [vmem:[%s7 + $0x40] sm:$0xff]
  %v646 = vld [vmem:[%s7 + $0x48] sm:$0xff]
  %v647 = vld [vmem:[%s7 + $0x50] sm:$0xff]
  %v648 = vld [vmem:[%s7 + $0x58] sm:$0xff]
  %v649 = vld [vmem:[%s7 + $0x60] sm:$0xff]
  %v650 = vld [vmem:[%s7 + $0x68] sm:$0xff]
  %v651 = vld [vmem:[%s7 + $0x70] sm:$0xff]
  %v652 = vld [vmem:[%s7 + $0x78] sm:$0xff]
  %v653 = vld [vmem:[%s8] sm:$0x3]
  %v655 = vperm.slane %v653, 0
  %v656 = vperm.slane %v653, 1
  %v660 = vsel %vm473, %v630, 0
  %662 = vmatpush.msra.mxu0 0.0
  %663 = vmatpush.msra.mxu0 0.0
  %664 = vmatpush.msra.mxu0 0.0
  %665 = vmatpush.msra.mxu0 0.0
  %666 = vmatpush.msra.mxu0 0.0
  %667 = vmatpush.msra.mxu0 0.0
  %668 = vmatpush.msra.mxu0 0.0
  %669 = vmatpush.msra.mxu0 0.0
  %670 = vmatpush.msra.mxu0 %v651
  %671 = vmatpush.msra.mxu0 %v649
  %672 = vmatpush.msra.mxu0 %v647
  %673 = vmatpush.msra.mxu0 %v645
  %674 = vmatpush.msra.mxu0 %v643
  %675 = vmatpush.msra.mxu0 %v641
  %676 = vmatpush.msra.mxu0 %v639
  %677 = vmatpush.msra.mxu0 %v637
  %678 = vmatmul.f32.gmra.mxu0 %v660
  %v679 = vpop.f32.mrf.mxu0
  %v680 = vadd.f32 %v655, %v679
  %681 = vdwg.mxu0
  %682 = vmatpush.msra.mxu0 0.0
  %683 = vmatpush.msra.mxu0 0.0
  %684 = vmatpush.msra.mxu0 0.0
  %685 = vmatpush.msra.mxu0 0.0
  %686 = vmatpush.msra.mxu0 0.0
  %687 = vmatpush.msra.mxu0 0.0
  %688 = vmatpush.msra.mxu0 0.0
  %689 = vmatpush.msra.mxu0 0.0
  %690 = vmatpush.msra.mxu0 %v652
  %691 = vmatpush.msra.mxu0 %v650
  %692 = vmatpush.msra.mxu0 %v648
  %693 = vmatpush.msra.mxu0 %v646
  %694 = vmatpush.msra.mxu0 %v644
  %695 = vmatpush.msra.mxu0 %v642
  %696 = vmatpush.msra.mxu0 %v640
  %697 = vmatpush.msra.mxu0 %v638
  %698 = vmatmul.f32.gmra.mxu0 %v660
  %v699 = vpop.f32.mrf.mxu0
  %v700 = vadd.f32 %v656, %v699
  %701 = vdwg.mxu0
  %v703 = vrot.slane %v680, 6
  %v705 = vadd.f32 %v415, %v703
  %v706 = vxor.u32 %v705, 2147483648
  %v707 = vmul.f32 %v706, 1.442695
  %v708 = vpow.pop %v707
  %v709 = vadd.f32 %v708, 1.0
  %v710 = vrcp.pop %v709
  %v711 = vmul.f32 %v709, %v710
  %v712 = vsub.f32 1.0, %v711
  %v713 = vmul.f32 %v710, %v712
  %v714 = vadd.f32 %v710, %v713
  %vm715 = vweird.f32 %v709
  %vm716 = vweird.f32 %v710
  %vm717 = vmor %vm715, %vm716
  %v718 = vsel %vm717, %v710, %v714
  %v719 = vand.u32 2147483647, %v709
  %vm720 = vcmp.eq.f32.partialorder %v719, 8.507059e+37
  %v721 = vand.u32 %v709, 2147483648
  %v722 = vor.u32 1.1754944e-38, %v721
  %v723 = vsel %vm720, %v722, %v718
  %v724 = vmul.f32 1.0, %v723
  %725 = vrot.lane.b32.xlu0 %v703, 64
  %v726 = vpop.permute.xlu0 %725
  %v728 = vmul.f32 %v724, %v726
  %730 = vrot.lane.b32.xlu0 %v728, 64
  %v731 = vpop.permute.xlu0 %730
  %v733 = vadd.f32 %v415, %v731
  %v734 = vtanh.pop %v733
  %v735 = vsub.f32 1.0, %v724
  %737 = vrot.lane.b32.xlu0 %v734, 96
  %v738 = vpop.permute.xlu0 %737
  %v740 = vmul.f32 %v735, %v738
  %v741 = vrot.slane %v630, 6
  %742 = vrot.lane.b32.xlu0 %v741, 32
  %v743 = vpop.permute.xlu0 %742
  %v745 = vmul.f32 %v724, %v743
  %v746 = vadd.f32 %v740, %v745
  %747 = vrot.lane.b32.xlu0 %v680, 32
  %v748 = vpop.permute.xlu0 %747
  %v750 = vadd.f32 %v449, %v748
  %v751 = vxor.u32 %v750, 2147483648
  %v752 = vmul.f32 %v751, 1.442695
  %v753 = vpow.pop %v752
  %v754 = vadd.f32 %v753, 1.0
  %v755 = vrcp.pop %v754
  %v756 = vmul.f32 %v754, %v755
  %v757 = vsub.f32 1.0, %v756
  %v758 = vmul.f32 %v755, %v757
  %v759 = vadd.f32 %v755, %v758
  %vm760 = vweird.f32 %v754
  %vm761 = vweird.f32 %v755
  %vm762 = vmor %vm760, %vm761
  %v763 = vsel %vm762, %v755, %v759
  %v764 = vand.u32 2147483647, %v754
  %vm765 = vcmp.eq.f32.partialorder %v764, 8.507059e+37
  %v766 = vand.u32 %v754, 2147483648
  %v767 = vor.u32 1.1754944e-38, %v766
  %v768 = vsel %vm765, %v767, %v763
  %v769 = vmul.f32 1.0, %v768
  %771 = vrot.lane.b32.xlu0 %v700, 32
  %v772 = vpop.permute.xlu0 %771
  %v774 = vadd.f32 %v449, %v772
  %v775 = vxor.u32 %v774, 2147483648
  %v776 = vmul.f32 %v775, 1.442695
  %v777 = vpow.pop %v776
  %v778 = vadd.f32 %v777, 1.0
  %v779 = vrcp.pop %v778
  %v780 = vmul.f32 %v778, %v779
  %v781 = vsub.f32 1.0, %v780
  %v782 = vmul.f32 %v779, %v781
  %v783 = vadd.f32 %v779, %v782
  %vm784 = vweird.f32 %v778
  %vm785 = vweird.f32 %v779
  %vm786 = vmor %vm784, %vm785
  %v787 = vsel %vm786, %v779, %v783
  %v788 = vand.u32 2147483647, %v778
  %vm789 = vcmp.eq.f32.partialorder %v788, 8.507059e+37
  %v790 = vand.u32 %v778, 2147483648
  %v791 = vor.u32 1.1754944e-38, %v790
  %v792 = vsel %vm789, %v791, %v787
  %v793 = vmul.f32 1.0, %v792
  %794 = vrot.lane.b32.xlu0 %v700, 96
  %v795 = vpop.permute.xlu0 %794
  %v797 = vmul.f32 %v769, %v795
  %799 = vrot.lane.b32.xlu0 %v797, 64
  %v800 = vpop.permute.xlu0 %799
  %v802 = vadd.f32 %v449, %v800
  %v803 = vtanh.pop %v802
  %v804 = vsub.f32 1.0, %v793
  %806 = vrot.lane.b32.xlu0 %v803, 96
  %v807 = vpop.permute.xlu0 %806
  %v809 = vmul.f32 %v804, %v807
  %v810 = vmul.f32 %v793, %v630
  %v811 = vadd.f32 %v809, %v810
  %813 = vrot.lane.b32.xlu0 %v746, 96
  %v814 = vpop.permute.xlu0 %813
  %v817 = vrot.slane %v811, 6
  %v819 = vsel %vm390, %v814, %v817
  %820 = vst.msk [vmem:[#allocation4] sm:$0xc] %vm635, %v814
  %821 = vrot.lane.b32.xlu0 %v811, 96
  %v822 = vpop.permute.xlu0 %821
  %824 = vst.msk [vmem:[#allocation5 + $0x8] sm:$0x3] %vm259, %v822
  %v825 = vld [vmem:[%s7] sm:$0xff]
  %v826 = vld [vmem:[%s7 + $0x8] sm:$0xff]
  %v827 = vld [vmem:[%s7 + $0x10] sm:$0xff]
  %v828 = vld [vmem:[%s7 + $0x18] sm:$0xff]
  %v829 = vld [vmem:[%s7 + $0x20] sm:$0xff]
  %v830 = vld [vmem:[%s7 + $0x28] sm:$0xff]
  %v831 = vld [vmem:[%s7 + $0x30] sm:$0xff]
  %v832 = vld [vmem:[%s7 + $0x38] sm:$0xff]
  %v833 = vld [vmem:[%s7 + $0x40] sm:$0xff]
  %v834 = vld [vmem:[%s7 + $0x48] sm:$0xff]
  %v835 = vld [vmem:[%s7 + $0x50] sm:$0xff]
  %v836 = vld [vmem:[%s7 + $0x58] sm:$0xff]
  %v837 = vld [vmem:[%s7 + $0x60] sm:$0xff]
  %v838 = vld [vmem:[%s7 + $0x68] sm:$0xff]
  %v839 = vld [vmem:[%s7 + $0x70] sm:$0xff]
  %v840 = vld [vmem:[%s7 + $0x78] sm:$0xff]
  %v841 = vld [vmem:[%s8] sm:$0x3]
  %v843 = vperm.slane %v841, 0
  %v844 = vperm.slane %v841, 1
  %v848 = vrot.slane %v819, 2
  %v849 = vsel %vm473, %v848, 0
  %851 = vmatpush.msra.mxu0 0.0
  %852 = vmatpush.msra.mxu0 0.0
  %853 = vmatpush.msra.mxu0 0.0
  %854 = vmatpush.msra.mxu0 0.0
  %855 = vmatpush.msra.mxu0 0.0
  %856 = vmatpush.msra.mxu0 0.0
  %857 = vmatpush.msra.mxu0 0.0
  %858 = vmatpush.msra.mxu0 0.0
  %859 = vmatpush.msra.mxu0 %v839
  %860 = vmatpush.msra.mxu0 %v837
  %861 = vmatpush.msra.mxu0 %v835
  %862 = vmatpush.msra.mxu0 %v833
  %863 = vmatpush.msra.mxu0 %v831
  %864 = vmatpush.msra.mxu0 %v829
  %865 = vmatpush.msra.mxu0 %v827
  %866 = vmatpush.msra.mxu0 %v825
  %867 = vmatmul.f32.gmra.mxu0 %v849
  %v868 = vpop.f32.mrf.mxu0
  %v869 = vadd.f32 %v843, %v868
  %870 = vdwg.mxu0
  %871 = vmatpush.msra.mxu0 0.0
  %872 = vmatpush.msra.mxu0 0.0
  %873 = vmatpush.msra.mxu0 0.0
  %874 = vmatpush.msra.mxu0 0.0
  %875 = vmatpush.msra.mxu0 0.0
  %876 = vmatpush.msra.mxu0 0.0
  %877 = vmatpush.msra.mxu0 0.0
  %878 = vmatpush.msra.mxu0 0.0
  %879 = vmatpush.msra.mxu0 %v840
  %880 = vmatpush.msra.mxu0 %v838
  %881 = vmatpush.msra.mxu0 %v836
  %882 = vmatpush.msra.mxu0 %v834
  %883 = vmatpush.msra.mxu0 %v832
  %884 = vmatpush.msra.mxu0 %v830
  %885 = vmatpush.msra.mxu0 %v828
  %886 = vmatpush.msra.mxu0 %v826
  %887 = vmatmul.f32.gmra.mxu0 %v849
  %v888 = vpop.f32.mrf.mxu0
  %v889 = vadd.f32 %v844, %v888
  %890 = vdwg.mxu0
  %v892 = vrot.slane %v869, 4
  %v894 = vadd.f32 %v415, %v892
  %v895 = vxor.u32 %v894, 2147483648
  %v896 = vmul.f32 %v895, 1.442695
  %v897 = vpow.pop %v896
  %v898 = vadd.f32 %v897, 1.0
  %v899 = vrcp.pop %v898
  %v900 = vmul.f32 %v898, %v899
  %v901 = vsub.f32 1.0, %v900
  %v902 = vmul.f32 %v899, %v901
  %v903 = vadd.f32 %v899, %v902
  %vm904 = vweird.f32 %v898
  %vm905 = vweird.f32 %v899
  %vm906 = vmor %vm904, %vm905
  %v907 = vsel %vm906, %v899, %v903
  %v908 = vand.u32 2147483647, %v898
  %vm909 = vcmp.eq.f32.partialorder %v908, 8.507059e+37
  %v910 = vand.u32 %v898, 2147483648
  %v911 = vor.u32 1.1754944e-38, %v910
  %v912 = vsel %vm909, %v911, %v907
  %v913 = vmul.f32 1.0, %v912
  %914 = vrot.lane.b32.xlu0 %v892, 64
  %v915 = vpop.permute.xlu0 %914
  %v917 = vmul.f32 %v913, %v915
  %919 = vrot.lane.b32.xlu0 %v917, 64
  %v920 = vpop.permute.xlu0 %919
  %v922 = vadd.f32 %v415, %v920
  %v923 = vtanh.pop %v922
  %v924 = vsub.f32 1.0, %v913
  %926 = vrot.lane.b32.xlu0 %v923, 96
  %v927 = vpop.permute.xlu0 %926
  %v929 = vmul.f32 %v924, %v927
  %v930 = vrot.slane %v819, 6
  %931 = vrot.lane.b32.xlu0 %v930, 32
  %v932 = vpop.permute.xlu0 %931
  %v934 = vmul.f32 %v913, %v932
  %v935 = vadd.f32 %v929, %v934
  %v936 = vrot.slane %v869, 2
  %937 = vrot.lane.b32.xlu0 %v936, 32
  %v938 = vpop.permute.xlu0 %937
  %v940 = vadd.f32 %v446, %v938
  %v941 = vxor.u32 %v940, 2147483648
  %v942 = vmul.f32 %v941, 1.442695
  %v943 = vpow.pop %v942
  %v944 = vadd.f32 %v943, 1.0
  %v945 = vrcp.pop %v944
  %v946 = vmul.f32 %v944, %v945
  %v947 = vsub.f32 1.0, %v946
  %v948 = vmul.f32 %v945, %v947
  %v949 = vadd.f32 %v945, %v948
  %vm950 = vweird.f32 %v944
  %vm951 = vweird.f32 %v945
  %vm952 = vmor %vm950, %vm951
  %v953 = vsel %vm952, %v945, %v949
  %v954 = vand.u32 2147483647, %v944
  %vm955 = vcmp.eq.f32.partialorder %v954, 8.507059e+37
  %v956 = vand.u32 %v944, 2147483648
  %v957 = vor.u32 1.1754944e-38, %v956
  %v958 = vsel %vm955, %v957, %v953
  %v959 = vmul.f32 1.0, %v958
  %v961 = vrot.slane %v889, 2
  %962 = vrot.lane.b32.xlu0 %v961, 32
  %v963 = vpop.permute.xlu0 %962
  %v965 = vadd.f32 %v446, %v963
  %v966 = vxor.u32 %v965, 2147483648
  %v967 = vmul.f32 %v966, 1.442695
  %v968 = vpow.pop %v967
  %v969 = vadd.f32 %v968, 1.0
  %v970 = vrcp.pop %v969
  %v971 = vmul.f32 %v969, %v970
  %v972 = vsub.f32 1.0, %v971
  %v973 = vmul.f32 %v970, %v972
  %v974 = vadd.f32 %v970, %v973
  %vm975 = vweird.f32 %v969
  %vm976 = vweird.f32 %v970
  %vm977 = vmor %vm975, %vm976
  %v978 = vsel %vm977, %v970, %v974
  %v979 = vand.u32 2147483647, %v969
  %vm980 = vcmp.eq.f32.partialorder %v979, 8.507059e+37
  %v981 = vand.u32 %v969, 2147483648
  %v982 = vor.u32 1.1754944e-38, %v981
  %v983 = vsel %vm980, %v982, %v978
  %v984 = vmul.f32 1.0, %v983
  %985 = vrot.lane.b32.xlu0 %v961, 96
  %v986 = vpop.permute.xlu0 %985
  %v988 = vmul.f32 %v959, %v986
  %990 = vrot.lane.b32.xlu0 %v988, 64
  %v991 = vpop.permute.xlu0 %990
  %v993 = vadd.f32 %v446, %v991
  %v994 = vtanh.pop %v993
  %v995 = vsub.f32 1.0, %v984
  %997 = vrot.lane.b32.xlu0 %v994, 96
  %v998 = vpop.permute.xlu0 %997
  %v1000 = vmul.f32 %v995, %v998
  %v1001 = vrot.slane %v819, 4
  %v1003 = vmul.f32 %v984, %v1001
  %v1004 = vadd.f32 %v1000, %v1003
  %1006 = vrot.lane.b32.xlu0 %v935, 96
  %v1007 = vpop.permute.xlu0 %1006
  %v1010 = vrot.slane %v1004, 2
  %v1012 = vsel %vm390, %v1007, %v1010
  %vm1013 = vcmask 259076
  %1014 = vst.msk [vmem:[#allocation4] sm:$0x30] %vm1013, %v1007
  %1015 = vrot.lane.b32.xlu0 %v1004, 96
  %v1016 = vpop.permute.xlu0 %1015
  %1018 = vst.msk [vmem:[#allocation5] sm:$0xc0] %vm360, %v1016
  %v1019 = vld [vmem:[%s7] sm:$0xff]
  %v1020 = vld [vmem:[%s7 + $0x8] sm:$0xff]
  %v1021 = vld [vmem:[%s7 + $0x10] sm:$0xff]
  %v1022 = vld [vmem:[%s7 + $0x18] sm:$0xff]
  %v1023 = vld [vmem:[%s7 + $0x20] sm:$0xff]
  %v1024 = vld [vmem:[%s7 + $0x28] sm:$0xff]
  %v1025 = vld [vmem:[%s7 + $0x30] sm:$0xff]
  %v1026 = vld [vmem:[%s7 + $0x38] sm:$0xff]
  %v1027 = vld [vmem:[%s7 + $0x40] sm:$0xff]
  %v1028 = vld [vmem:[%s7 + $0x48] sm:$0xff]
  %v1029 = vld [vmem:[%s7 + $0x50] sm:$0xff]
  %v1030 = vld [vmem:[%s7 + $0x58] sm:$0xff]
  %v1031 = vld [vmem:[%s7 + $0x60] sm:$0xff]
  %v1032 = vld [vmem:[%s7 + $0x68] sm:$0xff]
  %v1033 = vld [vmem:[%s7 + $0x70] sm:$0xff]
  %v1034 = vld [vmem:[%s7 + $0x78] sm:$0xff]
  %v1035 = vld [vmem:[%s8] sm:$0x3]
  %v1037 = vperm.slane %v1035, 0
  %v1038 = vperm.slane %v1035, 1
  %v1042 = vrot.slane %v1012, 4
  %v1043 = vsel %vm473, %v1042, 0
  %1045 = vmatpush.msra.mxu0 0.0
  %1046 = vmatpush.msra.mxu0 0.0
  %1047 = vmatpush.msra.mxu0 0.0
  %1048 = vmatpush.msra.mxu0 0.0
  %1049 = vmatpush.msra.mxu0 0.0
  %1050 = vmatpush.msra.mxu0 0.0
  %1051 = vmatpush.msra.mxu0 0.0
  %1052 = vmatpush.msra.mxu0 0.0
  %1053 = vmatpush.msra.mxu0 %v1033
  %1054 = vmatpush.msra.mxu0 %v1031
  %1055 = vmatpush.msra.mxu0 %v1029
  %1056 = vmatpush.msra.mxu0 %v1027
  %1057 = vmatpush.msra.mxu0 %v1025
  %1058 = vmatpush.msra.mxu0 %v1023
  %1059 = vmatpush.msra.mxu0 %v1021
  %1060 = vmatpush.msra.mxu0 %v1019
  %1061 = vmatmul.f32.gmra.mxu0 %v1043
  %v1062 = vpop.f32.mrf.mxu0
  %v1063 = vadd.f32 %v1037, %v1062
  %1064 = vdwg.mxu0
  %1065 = vmatpush.msra.mxu0 0.0
  %1066 = vmatpush.msra.mxu0 0.0
  %1067 = vmatpush.msra.mxu0 0.0
  %1068 = vmatpush.msra.mxu0 0.0
  %1069 = vmatpush.msra.mxu0 0.0
  %1070 = vmatpush.msra.mxu0 0.0
  %1071 = vmatpush.msra.mxu0 0.0
  %1072 = vmatpush.msra.mxu0 0.0
  %1073 = vmatpush.msra.mxu0 %v1034
  %1074 = vmatpush.msra.mxu0 %v1032
  %1075 = vmatpush.msra.mxu0 %v1030
  %1076 = vmatpush.msra.mxu0 %v1028
  %1077 = vmatpush.msra.mxu0 %v1026
  %1078 = vmatpush.msra.mxu0 %v1024
  %1079 = vmatpush.msra.mxu0 %v1022
  %1080 = vmatpush.msra.mxu0 %v1020
  %1081 = vmatmul.f32.gmra.mxu0 %v1043
  %v1082 = vpop.f32.mrf.mxu0
  %v1083 = vadd.f32 %v1038, %v1082
  %1084 = vdwg.mxu0
  %v1086 = vrot.slane %v1063, 2
  %v1088 = vadd.f32 %v415, %v1086
  %v1089 = vxor.u32 %v1088, 2147483648
  %v1090 = vmul.f32 %v1089, 1.442695
  %v1091 = vpow.pop %v1090
  %v1092 = vadd.f32 %v1091, 1.0
  %v1093 = vrcp.pop %v1092
  %v1094 = vmul.f32 %v1092, %v1093
  %v1095 = vsub.f32 1.0, %v1094
  %v1096 = vmul.f32 %v1093, %v1095
  %v1097 = vadd.f32 %v1093, %v1096
  %vm1098 = vweird.f32 %v1092
  %vm1099 = vweird.f32 %v1093
  %vm1100 = vmor %vm1098, %vm1099
  %v1101 = vsel %vm1100, %v1093, %v1097
  %v1102 = vand.u32 2147483647, %v1092
  %vm1103 = vcmp.eq.f32.partialorder %v1102, 8.507059e+37
  %v1104 = vand.u32 %v1092, 2147483648
  %v1105 = vor.u32 1.1754944e-38, %v1104
  %v1106 = vsel %vm1103, %v1105, %v1101
  %v1107 = vmul.f32 1.0, %v1106
  %1108 = vrot.lane.b32.xlu0 %v1086, 64
  %v1109 = vpop.permute.xlu0 %1108
  %v1111 = vmul.f32 %v1107, %v1109
  %1113 = vrot.lane.b32.xlu0 %v1111, 64
  %v1114 = vpop.permute.xlu0 %1113
  %v1116 = vadd.f32 %v415, %v1114
  %v1117 = vtanh.pop %v1116
  %v1118 = vsub.f32 1.0, %v1107
  %1120 = vrot.lane.b32.xlu0 %v1117, 96
  %v1121 = vpop.permute.xlu0 %1120
  %v1123 = vmul.f32 %v1118, %v1121
  %v1124 = vrot.slane %v1012, 6
  %1125 = vrot.lane.b32.xlu0 %v1124, 32
  %v1126 = vpop.permute.xlu0 %1125
  %v1128 = vmul.f32 %v1107, %v1126
  %v1129 = vadd.f32 %v1123, %v1128
  %v1130 = vrot.slane %v1063, 4
  %1131 = vrot.lane.b32.xlu0 %v1130, 32
  %v1132 = vpop.permute.xlu0 %1131
  %v1134 = vadd.f32 %v446, %v1132
  %v1135 = vxor.u32 %v1134, 2147483648
  %v1136 = vmul.f32 %v1135, 1.442695
  %v1137 = vpow.pop %v1136
  %v1138 = vadd.f32 %v1137, 1.0
  %v1139 = vrcp.pop %v1138
  %v1140 = vmul.f32 %v1138, %v1139
  %v1141 = vsub.f32 1.0, %v1140
  %v1142 = vmul.f32 %v1139, %v1141
  %v1143 = vadd.f32 %v1139, %v1142
  %vm1144 = vweird.f32 %v1138
  %vm1145 = vweird.f32 %v1139
  %vm1146 = vmor %vm1144, %vm1145
  %v1147 = vsel %vm1146, %v1139, %v1143
  %v1148 = vand.u32 2147483647, %v1138
  %vm1149 = vcmp.eq.f32.partialorder %v1148, 8.507059e+37
  %v1150 = vand.u32 %v1138, 2147483648
  %v1151 = vor.u32 1.1754944e-38, %v1150
  %v1152 = vsel %vm1149, %v1151, %v1147
  %v1153 = vmul.f32 1.0, %v1152
  %v1155 = vrot.slane %v1083, 4
  %1156 = vrot.lane.b32.xlu0 %v1155, 32
  %v1157 = vpop.permute.xlu0 %1156
  %v1159 = vadd.f32 %v446, %v1157
  %v1160 = vxor.u32 %v1159, 2147483648
  %v1161 = vmul.f32 %v1160, 1.442695
  %v1162 = vpow.pop %v1161
  %v1163 = vadd.f32 %v1162, 1.0
  %v1164 = vrcp.pop %v1163
  %v1165 = vmul.f32 %v1163, %v1164
  %v1166 = vsub.f32 1.0, %v1165
  %v1167 = vmul.f32 %v1164, %v1166
  %v1168 = vadd.f32 %v1164, %v1167
  %vm1169 = vweird.f32 %v1163
  %vm1170 = vweird.f32 %v1164
  %vm1171 = vmor %vm1169, %vm1170
  %v1172 = vsel %vm1171, %v1164, %v1168
  %v1173 = vand.u32 2147483647, %v1163
  %vm1174 = vcmp.eq.f32.partialorder %v1173, 8.507059e+37
  %v1175 = vand.u32 %v1163, 2147483648
  %v1176 = vor.u32 1.1754944e-38, %v1175
  %v1177 = vsel %vm1174, %v1176, %v1172
  %v1178 = vmul.f32 1.0, %v1177
  %1179 = vrot.lane.b32.xlu0 %v1155, 96
  %v1180 = vpop.permute.xlu0 %1179
  %v1182 = vmul.f32 %v1153, %v1180
  %1184 = vrot.lane.b32.xlu0 %v1182, 64
  %v1185 = vpop.permute.xlu0 %1184
  %v1187 = vadd.f32 %v446, %v1185
  %v1188 = vtanh.pop %v1187
  %v1189 = vsub.f32 1.0, %v1178
  %1191 = vrot.lane.b32.xlu0 %v1188, 96
  %v1192 = vpop.permute.xlu0 %1191
  %v1194 = vmul.f32 %v1189, %v1192
  %v1195 = vmul.f32 %v1178, %v1012
  %v1196 = vadd.f32 %v1194, %v1195
  %1198 = vrot.lane.b32.xlu0 %v1129, 96
  %v1199 = vpop.permute.xlu0 %1198
  %v1202 = vrot.slane %v1196, 6
  %v1204 = vsel %vm390, %v1199, %v1202
  %1205 = vst.msk [vmem:[#allocation4] sm:$0xc0] %vm360, %v1199
  %1206 = vrot.lane.b32.xlu0 %v1196, 96
  %v1207 = vpop.permute.xlu0 %1206
  %1209 = vst.msk [vmem:[#allocation5] sm:$0x30] %vm1013, %v1207
  %v1210 = vld [vmem:[%s7] sm:$0xff]
  %v1211 = vld [vmem:[%s7 + $0x8] sm:$0xff]
  %v1212 = vld [vmem:[%s7 + $0x10] sm:$0xff]
  %v1213 = vld [vmem:[%s7 + $0x18] sm:$0xff]
  %v1214 = vld [vmem:[%s7 + $0x20] sm:$0xff]
  %v1215 = vld [vmem:[%s7 + $0x28] sm:$0xff]
  %v1216 = vld [vmem:[%s7 + $0x30] sm:$0xff]
  %v1217 = vld [vmem:[%s7 + $0x38] sm:$0xff]
  %v1218 = vld [vmem:[%s7 + $0x40] sm:$0xff]
  %v1219 = vld [vmem:[%s7 + $0x48] sm:$0xff]
  %v1220 = vld [vmem:[%s7 + $0x50] sm:$0xff]
  %v1221 = vld [vmem:[%s7 + $0x58] sm:$0xff]
  %v1222 = vld [vmem:[%s7 + $0x60] sm:$0xff]
  %v1223 = vld [vmem:[%s7 + $0x68] sm:$0xff]
  %v1224 = vld [vmem:[%s7 + $0x70] sm:$0xff]
  %v1225 = vld [vmem:[%s7 + $0x78] sm:$0xff]
  %v1226 = vld [vmem:[%s8] sm:$0x3]
  %v1228 = vperm.slane %v1226, 0
  %v1229 = vperm.slane %v1226, 1
  %v1233 = vrot.slane %v1204, 6
  %v1234 = vsel %vm473, %v1233, 0
  %1236 = vmatpush.msra.mxu0 0.0
  %1237 = vmatpush.msra.mxu0 0.0
  %1238 = vmatpush.msra.mxu0 0.0
  %1239 = vmatpush.msra.mxu0 0.0
  %1240 = vmatpush.msra.mxu0 0.0
  %1241 = vmatpush.msra.mxu0 0.0
  %1242 = vmatpush.msra.mxu0 0.0
  %1243 = vmatpush.msra.mxu0 0.0
  %1244 = vmatpush.msra.mxu0 %v1224
  %1245 = vmatpush.msra.mxu0 %v1222
  %1246 = vmatpush.msra.mxu0 %v1220
  %1247 = vmatpush.msra.mxu0 %v1218
  %1248 = vmatpush.msra.mxu0 %v1216
  %1249 = vmatpush.msra.mxu0 %v1214
  %1250 = vmatpush.msra.mxu0 %v1212
  %1251 = vmatpush.msra.mxu0 %v1210
  %1252 = vmatmul.f32.gmra.mxu0 %v1234
  %v1253 = vpop.f32.mrf.mxu0
  %v1254 = vadd.f32 %v1228, %v1253
  %1255 = vdwg.mxu0
  %1256 = vmatpush.msra.mxu0 0.0
  %1257 = vmatpush.msra.mxu0 0.0
  %1258 = vmatpush.msra.mxu0 0.0
  %1259 = vmatpush.msra.mxu0 0.0
  %1260 = vmatpush.msra.mxu0 0.0
  %1261 = vmatpush.msra.mxu0 0.0
  %1262 = vmatpush.msra.mxu0 0.0
  %1263 = vmatpush.msra.mxu0 0.0
  %1264 = vmatpush.msra.mxu0 %v1225
  %1265 = vmatpush.msra.mxu0 %v1223
  %1266 = vmatpush.msra.mxu0 %v1221
  %1267 = vmatpush.msra.mxu0 %v1219
  %1268 = vmatpush.msra.mxu0 %v1217
  %1269 = vmatpush.msra.mxu0 %v1215
  %1270 = vmatpush.msra.mxu0 %v1213
  %1271 = vmatpush.msra.mxu0 %v1211
  %1272 = vmatmul.f32.gmra.mxu0 %v1234
  %v1273 = vpop.f32.mrf.mxu0
  %v1274 = vadd.f32 %v1229, %v1273
  %1275 = vdwg.mxu0
  %v1276 = vadd.f32 %v418, %v1254
  %v1277 = vxor.u32 %v1276, 2147483648
  %v1278 = vmul.f32 %v1277, 1.442695
  %v1279 = vpow.pop %v1278
  %v1280 = vadd.f32 %v1279, 1.0
  %v1281 = vrcp.pop %v1280
  %v1282 = vmul.f32 %v1280, %v1281
  %v1283 = vsub.f32 1.0, %v1282
  %v1284 = vmul.f32 %v1281, %v1283
  %v1285 = vadd.f32 %v1281, %v1284
  %vm1286 = vweird.f32 %v1280
  %vm1287 = vweird.f32 %v1281
  %vm1288 = vmor %vm1286, %vm1287
  %v1289 = vsel %vm1288, %v1281, %v1285
  %v1290 = vand.u32 2147483647, %v1280
  %vm1291 = vcmp.eq.f32.partialorder %v1290, 8.507059e+37
  %v1292 = vand.u32 %v1280, 2147483648
  %v1293 = vor.u32 1.1754944e-38, %v1292
  %v1294 = vsel %vm1291, %v1293, %v1289
  %v1295 = vmul.f32 1.0, %v1294
  %1297 = vrot.lane.b32.xlu0 %v1254, 64
  %v1298 = vpop.permute.xlu0 %1297
  %v1300 = vmul.f32 %v1295, %v1298
  %1302 = vrot.lane.b32.xlu0 %v1300, 64
  %v1303 = vpop.permute.xlu0 %1302
  %v1305 = vadd.f32 %v418, %v1303
  %v1306 = vtanh.pop %v1305
  %v1307 = vsub.f32 1.0, %v1295
  %1309 = vrot.lane.b32.xlu0 %v1306, 96
  %v1310 = vpop.permute.xlu0 %1309
  %v1312 = vmul.f32 %v1307, %v1310
  %1313 = vrot.lane.b32.xlu0 %v1233, 32
  %v1314 = vpop.permute.xlu0 %1313
  %v1316 = vmul.f32 %v1295, %v1314
  %v1317 = vadd.f32 %v1312, %v1316
  %v1318 = vrot.slane %v1254, 6
  %1319 = vrot.lane.b32.xlu0 %v1318, 32
  %v1320 = vpop.permute.xlu0 %1319
  %v1322 = vadd.f32 %v446, %v1320
  %v1323 = vxor.u32 %v1322, 2147483648
  %v1324 = vmul.f32 %v1323, 1.442695
  %v1325 = vpow.pop %v1324
  %v1326 = vadd.f32 %v1325, 1.0
  %v1327 = vrcp.pop %v1326
  %v1328 = vmul.f32 %v1326, %v1327
  %v1329 = vsub.f32 1.0, %v1328
  %v1330 = vmul.f32 %v1327, %v1329
  %v1331 = vadd.f32 %v1327, %v1330
  %vm1332 = vweird.f32 %v1326
  %vm1333 = vweird.f32 %v1327
  %vm1334 = vmor %vm1332, %vm1333
  %v1335 = vsel %vm1334, %v1327, %v1331
  %v1336 = vand.u32 2147483647, %v1326
  %vm1337 = vcmp.eq.f32.partialorder %v1336, 8.507059e+37
  %v1338 = vand.u32 %v1326, 2147483648
  %v1339 = vor.u32 1.1754944e-38, %v1338
  %v1340 = vsel %vm1337, %v1339, %v1335
  %v1341 = vmul.f32 1.0, %v1340
  %v1343 = vrot.slane %v1274, 6
  %1344 = vrot.lane.b32.xlu0 %v1343, 32
  %v1345 = vpop.permute.xlu0 %1344
  %v1347 = vadd.f32 %v446, %v1345
  %v1348 = vxor.u32 %v1347, 2147483648
  %v1349 = vmul.f32 %v1348, 1.442695
  %v1350 = vpow.pop %v1349
  %v1351 = vadd.f32 %v1350, 1.0
  %v1352 = vrcp.pop %v1351
  %v1353 = vmul.f32 %v1351, %v1352
  %v1354 = vsub.f32 1.0, %v1353
  %v1355 = vmul.f32 %v1352, %v1354
  %v1356 = vadd.f32 %v1352, %v1355
  %vm1357 = vweird.f32 %v1351
  %vm1358 = vweird.f32 %v1352
  %vm1359 = vmor %vm1357, %vm1358
  %v1360 = vsel %vm1359, %v1352, %v1356
  %v1361 = vand.u32 2147483647, %v1351
  %vm1362 = vcmp.eq.f32.partialorder %v1361, 8.507059e+37
  %v1363 = vand.u32 %v1351, 2147483648
  %v1364 = vor.u32 1.1754944e-38, %v1363
  %v1365 = vsel %vm1362, %v1364, %v1360
  %v1366 = vmul.f32 1.0, %v1365
  %1367 = vrot.lane.b32.xlu0 %v1343, 96
  %v1368 = vpop.permute.xlu0 %1367
  %v1370 = vmul.f32 %v1341, %v1368
  %1372 = vrot.lane.b32.xlu0 %v1370, 64
  %v1373 = vpop.permute.xlu0 %1372
  %v1375 = vadd.f32 %v446, %v1373
  %v1376 = vtanh.pop %v1375
  %v1377 = vsub.f32 1.0, %v1366
  %1379 = vrot.lane.b32.xlu0 %v1376, 96
  %v1380 = vpop.permute.xlu0 %1379
  %v1382 = vmul.f32 %v1377, %v1380
  %v1383 = vrot.slane %v1204, 4
  %v1385 = vmul.f32 %v1366, %v1383
  %v1386 = vadd.f32 %v1382, %v1385
  %1388 = vrot.lane.b32.xlu0 %v1317, 96
  %v1389 = vpop.permute.xlu0 %1388
  %v1392 = vrot.slane %v1386, 2
  %v1394 = vsel %vm390, %v1389, %v1392
  %1395 = vst.msk [vmem:[#allocation4 + $0x8] sm:$0x3] %vm259, %v1389
  %1396 = vrot.lane.b32.xlu0 %v1386, 96
  %v1397 = vpop.permute.xlu0 %1396
  %1399 = vst.msk [vmem:[#allocation5] sm:$0xc] %vm635, %v1397
  %v1400 = vld [vmem:[%s7] sm:$0xff]
  %v1401 = vld [vmem:[%s7 + $0x8] sm:$0xff]
  %v1402 = vld [vmem:[%s7 + $0x10] sm:$0xff]
  %v1403 = vld [vmem:[%s7 + $0x18] sm:$0xff]
  %v1404 = vld [vmem:[%s7 + $0x20] sm:$0xff]
  %v1405 = vld [vmem:[%s7 + $0x28] sm:$0xff]
  %v1406 = vld [vmem:[%s7 + $0x30] sm:$0xff]
  %v1407 = vld [vmem:[%s7 + $0x38] sm:$0xff]
  %v1408 = vld [vmem:[%s7 + $0x40] sm:$0xff]
  %v1409 = vld [vmem:[%s7 + $0x48] sm:$0xff]
  %v1410 = vld [vmem:[%s7 + $0x50] sm:$0xff]
  %v1411 = vld [vmem:[%s7 + $0x58] sm:$0xff]
  %v1412 = vld [vmem:[%s7 + $0x60] sm:$0xff]
  %v1413 = vld [vmem:[%s7 + $0x68] sm:$0xff]
  %v1414 = vld [vmem:[%s7 + $0x70] sm:$0xff]
  %v1415 = vld [vmem:[%s7 + $0x78] sm:$0xff]
  %v1416 = vld [vmem:[%s8] sm:$0x3]
  %v1418 = vperm.slane %v1416, 0
  %v1419 = vperm.slane %v1416, 1
  %v1423 = vsel %vm473, %v1394, 0
  %1425 = vmatpush.msra.mxu0 0.0
  %1426 = vmatpush.msra.mxu0 0.0
  %1427 = vmatpush.msra.mxu0 0.0
  %1428 = vmatpush.msra.mxu0 0.0
  %1429 = vmatpush.msra.mxu0 0.0
  %1430 = vmatpush.msra.mxu0 0.0
  %1431 = vmatpush.msra.mxu0 0.0
  %1432 = vmatpush.msra.mxu0 0.0
  %1433 = vmatpush.msra.mxu0 %v1414
  %1434 = vmatpush.msra.mxu0 %v1412
  %1435 = vmatpush.msra.mxu0 %v1410
  %1436 = vmatpush.msra.mxu0 %v1408
  %1437 = vmatpush.msra.mxu0 %v1406
  %1438 = vmatpush.msra.mxu0 %v1404
  %1439 = vmatpush.msra.mxu0 %v1402
  %1440 = vmatpush.msra.mxu0 %v1400
  %1441 = vmatmul.f32.gmra.mxu0 %v1423
  %v1442 = vpop.f32.mrf.mxu0
  %v1443 = vadd.f32 %v1418, %v1442
  %1444 = vdwg.mxu0
  %1445 = vmatpush.msra.mxu0 0.0
  %1446 = vmatpush.msra.mxu0 0.0
  %1447 = vmatpush.msra.mxu0 0.0
  %1448 = vmatpush.msra.mxu0 0.0
  %1449 = vmatpush.msra.mxu0 0.0
  %1450 = vmatpush.msra.mxu0 0.0
  %1451 = vmatpush.msra.mxu0 0.0
  %1452 = vmatpush.msra.mxu0 0.0
  %1453 = vmatpush.msra.mxu0 %v1415
  %1454 = vmatpush.msra.mxu0 %v1413
  %1455 = vmatpush.msra.mxu0 %v1411
  %1456 = vmatpush.msra.mxu0 %v1409
  %1457 = vmatpush.msra.mxu0 %v1407
  %1458 = vmatpush.msra.mxu0 %v1405
  %1459 = vmatpush.msra.mxu0 %v1403
  %1460 = vmatpush.msra.mxu0 %v1401
  %1461 = vmatmul.f32.gmra.mxu0 %v1423
  %v1462 = vpop.f32.mrf.mxu0
  %v1463 = vadd.f32 %v1419, %v1462
  %1464 = vdwg.mxu0
  %v1466 = vrot.slane %v1443, 6
  %v1468 = vadd.f32 %v418, %v1466
  %v1469 = vxor.u32 %v1468, 2147483648
  %v1470 = vmul.f32 %v1469, 1.442695
  %v1471 = vpow.pop %v1470
  %v1472 = vadd.f32 %v1471, 1.0
  %v1473 = vrcp.pop %v1472
  %v1474 = vmul.f32 %v1472, %v1473
  %v1475 = vsub.f32 1.0, %v1474
  %v1476 = vmul.f32 %v1473, %v1475
  %v1477 = vadd.f32 %v1473, %v1476
  %vm1478 = vweird.f32 %v1472
  %vm1479 = vweird.f32 %v1473
  %vm1480 = vmor %vm1478, %vm1479
  %v1481 = vsel %vm1480, %v1473, %v1477
  %v1482 = vand.u32 2147483647, %v1472
  %vm1483 = vcmp.eq.f32.partialorder %v1482, 8.507059e+37
  %v1484 = vand.u32 %v1472, 2147483648
  %v1485 = vor.u32 1.1754944e-38, %v1484
  %v1486 = vsel %vm1483, %v1485, %v1481
  %v1487 = vmul.f32 1.0, %v1486
  %1488 = vrot.lane.b32.xlu0 %v1466, 64
  %v1489 = vpop.permute.xlu0 %1488
  %v1491 = vmul.f32 %v1487, %v1489
  %1493 = vrot.lane.b32.xlu0 %v1491, 64
  %v1494 = vpop.permute.xlu0 %1493
  %v1496 = vadd.f32 %v418, %v1494
  %v1497 = vtanh.pop %v1496
  %v1498 = vsub.f32 1.0, %v1487
  %1500 = vrot.lane.b32.xlu0 %v1497, 96
  %v1501 = vpop.permute.xlu0 %1500
  %v1503 = vmul.f32 %v1498, %v1501
  %v1504 = vrot.slane %v1394, 6
  %1505 = vrot.lane.b32.xlu0 %v1504, 32
  %v1506 = vpop.permute.xlu0 %1505
  %v1508 = vmul.f32 %v1487, %v1506
  %v1509 = vadd.f32 %v1503, %v1508
  %1510 = vrot.lane.b32.xlu0 %v1443, 32
  %v1511 = vpop.permute.xlu0 %1510
  %v1513 = vadd.f32 %v446, %v1511
  %v1514 = vxor.u32 %v1513, 2147483648
  %v1515 = vmul.f32 %v1514, 1.442695
  %v1516 = vpow.pop %v1515
  %v1517 = vadd.f32 %v1516, 1.0
  %v1518 = vrcp.pop %v1517
  %v1519 = vmul.f32 %v1517, %v1518
  %v1520 = vsub.f32 1.0, %v1519
  %v1521 = vmul.f32 %v1518, %v1520
  %v1522 = vadd.f32 %v1518, %v1521
  %vm1523 = vweird.f32 %v1517
  %vm1524 = vweird.f32 %v1518
  %vm1525 = vmor %vm1523, %vm1524
  %v1526 = vsel %vm1525, %v1518, %v1522
  %v1527 = vand.u32 2147483647, %v1517
  %vm1528 = vcmp.eq.f32.partialorder %v1527, 8.507059e+37
  %v1529 = vand.u32 %v1517, 2147483648
  %v1530 = vor.u32 1.1754944e-38, %v1529
  %v1531 = vsel %vm1528, %v1530, %v1526
  %v1532 = vmul.f32 1.0, %v1531
  %1534 = vrot.lane.b32.xlu0 %v1463, 32
  %v1535 = vpop.permute.xlu0 %1534
  %v1537 = vadd.f32 %v446, %v1535
  %v1538 = vxor.u32 %v1537, 2147483648
  %v1539 = vmul.f32 %v1538, 1.442695
  %v1540 = vpow.pop %v1539
  %v1541 = vadd.f32 %v1540, 1.0
  %v1542 = vrcp.pop %v1541
  %v1543 = vmul.f32 %v1541, %v1542
  %v1544 = vsub.f32 1.0, %v1543
  %v1545 = vmul.f32 %v1542, %v1544
  %v1546 = vadd.f32 %v1542, %v1545
  %vm1547 = vweird.f32 %v1541
  %vm1548 = vweird.f32 %v1542
  %vm1549 = vmor %vm1547, %vm1548
  %v1550 = vsel %vm1549, %v1542, %v1546
  %v1551 = vand.u32 2147483647, %v1541
  %vm1552 = vcmp.eq.f32.partialorder %v1551, 8.507059e+37
  %v1553 = vand.u32 %v1541, 2147483648
  %v1554 = vor.u32 1.1754944e-38, %v1553
  %v1555 = vsel %vm1552, %v1554, %v1550
  %v1556 = vmul.f32 1.0, %v1555
  %1557 = vrot.lane.b32.xlu0 %v1463, 96
  %v1558 = vpop.permute.xlu0 %1557
  %v1560 = vmul.f32 %v1532, %v1558
  %1562 = vrot.lane.b32.xlu0 %v1560, 64
  %v1563 = vpop.permute.xlu0 %1562
  %v1565 = vadd.f32 %v446, %v1563
  %v1566 = vtanh.pop %v1565
  %v1567 = vsub.f32 1.0, %v1556
  %1569 = vrot.lane.b32.xlu0 %v1566, 96
  %v1570 = vpop.permute.xlu0 %1569
  %v1572 = vmul.f32 %v1567, %v1570
  %v1573 = vmul.f32 %v1556, %v1394
  %v1574 = vadd.f32 %v1572, %v1573
  %1576 = vrot.lane.b32.xlu0 %v1509, 96
  %v1577 = vpop.permute.xlu0 %1576
  %1579 = vst.msk [vmem:[#allocation4 + $0x8] sm:$0xc] %vm635, %v1577
  %1581 = vrot.lane.b32.xlu0 %v1574, 96
  %v1582 = vpop.permute.xlu0 %1581
  %1584 = vst.msk [vmem:[#allocation5] sm:$0x3] %vm259, %v1582
  %v1585 = vld [vmem:[#allocation4] sm:$0xff]
  %v1586 = vld [vmem:[#allocation4 + $0x8] sm:$0xf]
  %v1587 = vld [vmem:[#allocation5] sm:$0xff]
  %v1588 = vld [vmem:[#allocation5 + $0x8] sm:$0xf]
  %v1589 = vadd.f32 %v1585, %v1587
  %v1590 = vadd.f32 %v1586, %v1588
  %v1591 = vsel %vm390, %v1589, 0.0
  %1592 = vadd.xlane.f32.xlu0 %v1591
  %v1593 = vpop.xlane.xlu0 %1592
  %vm1594 = vcmask 257024
  %v1595 = vsel %vm1594, %v1590, 0.0
  %1596 = vadd.xlane.f32.xlu0 %v1595
  %v1597 = vpop.xlane.xlu0 %1596
  %v1598 = vrcp.pop 32.0
  %v1599 = vmul.f32 32.0, %v1598
  %v1600 = vsub.f32 1.0, %v1599
  %v1601 = vmul.f32 %v1598, %v1600
  %v1602 = vadd.f32 %v1598, %v1601
  %vm1603 = vweird.f32 %v1598
  %v1604 = vsel %vm1603, %v1598, %v1602
  %v1605 = vmul.f32 %v1593, %v1604
  %v1606 = vmul.f32 %v1597, %v1604
  %v1607 = vsub.f32 %v1589, %v1605
  %v1608 = vsub.f32 %v1590, %v1606
  %v1609 = vmul.f32 %v1607, %v1607
  %v1610 = vmul.f32 %v1608, %v1608
  %v1611 = vsel %vm390, %v1609, 0.0
  %1612 = vadd.xlane.f32.xlu0 %v1611
  %v1613 = vpop.xlane.xlu0 %1612
  %v1614 = vsel %vm1594, %v1610, 0.0
  %1615 = vadd.xlane.f32.xlu0 %v1614
  %v1616 = vpop.xlane.xlu0 %1615
  %v1617 = vmul.f32 %v1613, %v1604
  %v1618 = vmul.f32 %v1616, %v1604
  %v1619 = vadd.f32 %v1617, 1e-05
  %v1620 = vadd.f32 %v1618, 1e-05
  %v1621 = vrsqrt.pop %v1619
  %v1622 = vmul.f32 %v1621, %v1619
  %v1623 = vmul.f32 %v1622, %v1621
  %v1624 = vmul.f32 0.5, %v1623
  %v1625 = vsub.f32 1.5, %v1624
  %v1626 = vmul.f32 %v1621, %v1625
  %vm1627 = vweird.f32 %v1619
  %vm1628 = vweird.f32 %v1621
  %vm1629 = vmor %vm1627, %vm1628
  %v1630 = vsel %vm1629, %v1621, %v1626
  %v1631 = vrsqrt.pop %v1620
  %v1632 = vmul.f32 %v1631, %v1620
  %v1633 = vmul.f32 %v1632, %v1631
  %v1634 = vmul.f32 0.5, %v1633
  %v1635 = vsub.f32 1.5, %v1634
  %v1636 = vmul.f32 %v1631, %v1635
  %vm1637 = vweird.f32 %v1620
  %vm1638 = vweird.f32 %v1631
  %vm1639 = vmor %vm1637, %vm1638
  %v1640 = vsel %vm1639, %v1631, %v1636
  %v1641 = vmul.f32 %v1607, %v1630
  %v1642 = vmul.f32 %v1608, %v1640
  %v1643 = vld [vmem:[%s9] sm:$0x1]
  %v1645 = vperm.slane %v1643, 0
  %v1647 = vmul.f32 %v1641, %v1645
  %v1648 = vmul.f32 %v1642, %v1645
  %v1649 = vld [vmem:[%s10] sm:$0x1]
  %v1651 = vperm.slane %v1649, 0
  %v1653 = vadd.f32 %v1647, %v1651
  %v1654 = vadd.f32 %v1648, %v1651
  %v1655 = vld [vmem:[%s11] sm:$0xff]
  %v1656 = vld [vmem:[%s11 + $0x8] sm:$0xff]
  %v1657 = vld [vmem:[%s11 + $0x10] sm:$0xff]
  %v1658 = vld [vmem:[%s11 + $0x18] sm:$0xff]
  %v1659 = vld [vmem:[%s12] sm:$0x1]
  %v1661 = vperm.slane %v1659, 0
  %v1664 = vsel %vm390, %v1653, 0
  %v1667 = vsel %vm390, %v1654, 0
  %1669 = vmatpush.msra.mxu0 0.0
  %1670 = vmatpush.msra.mxu0 0.0
  %1671 = vmatpush.msra.mxu0 0.0
  %1672 = vmatpush.msra.mxu0 0.0
  %1673 = vmatpush.msra.mxu0 0.0
  %1674 = vmatpush.msra.mxu0 0.0
  %1675 = vmatpush.msra.mxu0 0.0
  %1676 = vmatpush.msra.mxu0 0.0
  %1677 = vmatpush.msra.mxu0 0.0
  %1678 = vmatpush.msra.mxu0 0.0
  %1679 = vmatpush.msra.mxu0 0.0
  %1680 = vmatpush.msra.mxu0 0.0
  %1681 = vmatpush.msra.mxu0 %v1658
  %1682 = vmatpush.msra.mxu0 %v1657
  %1683 = vmatpush.msra.mxu0 %v1656
  %1684 = vmatpush.msra.mxu0 %v1655
  %1685 = vmatmul.f32.gmra.mxu0 %v1664
  %v1686 = vpop.f32.mrf.mxu0
  %v1687 = vadd.f32 %v1661, %v1686
  %1688 = vmatmul.f32.gmra.mxu0 %v1667
  %v1689 = vpop.f32.mrf.mxu0
  %v1690 = vadd.f32 %v1661, %v1689
  %1691 = vdwg.mxu0
  %v1692 = vmax.f32 %v1687, 0.0
  %v1693 = vmax.f32 %v1690, 0.0
  %v1694 = vld [vmem:[%s13] sm:$0xff]
  %v1695 = vld [vmem:[%s13 + $0x8] sm:$0xff]
  %v1696 = vld [vmem:[%s13 + $0x10] sm:$0xff]
  %v1697 = vld [vmem:[%s13 + $0x18] sm:$0xff]
  %v1698 = vld [vmem:[%s13 + $0x20] sm:$0xff]
  %v1699 = vld [vmem:[%s13 + $0x28] sm:$0xff]
  %v1700 = vld [vmem:[%s13 + $0x30] sm:$0xff]
  %v1701 = vld [vmem:[%s13 + $0x38] sm:$0xff]
  %v1702 = vld [vmem:[%s14] sm:$0x1]
  %v1704 = vperm.slane %v1702, 0
  %v1707 = vsel %vm473, %v1692, 0
  %v1710 = vsel %vm473, %v1693, 0
  %1712 = vmatpush.msra.mxu0 0.0
  %1713 = vmatpush.msra.mxu0 0.0
  %1714 = vmatpush.msra.mxu0 0.0
  %1715 = vmatpush.msra.mxu0 0.0
  %1716 = vmatpush.msra.mxu0 0.0
  %1717 = vmatpush.msra.mxu0 0.0
  %1718 = vmatpush.msra.mxu0 0.0
  %1719 = vmatpush.msra.mxu0 0.0
  %1720 = vmatpush.msra.mxu0 %v1701
  %1721 = vmatpush.msra.mxu0 %v1700
  %1722 = vmatpush.msra.mxu0 %v1699
  %1723 = vmatpush.msra.mxu0 %v1698
  %1724 = vmatpush.msra.mxu0 %v1697
  %1725 = vmatpush.msra.mxu0 %v1696
  %1726 = vmatpush.msra.mxu0 %v1695
  %1727 = vmatpush.msra.mxu0 %v1694
  %1728 = vmatmul.f32.gmra.mxu0 %v1707
  %v1729 = vpop.f32.mrf.mxu0
  %v1730 = vadd.f32 %v1704, %v1729
  %1731 = vmatmul.f32.gmra.mxu0 %v1710
  %v1732 = vpop.f32.mrf.mxu0
  %v1733 = vadd.f32 %v1704, %v1732
  %1734 = vdwg.mxu0
  %v1735 = vld [vmem:[%s15] sm:$0xff]
  %v1736 = vld [vmem:[%s15 + $0x8] sm:$0xff]
  %v1737 = vld [vmem:[%s15 + $0x10] sm:$0xff]
  %v1738 = vld [vmem:[%s15 + $0x18] sm:$0xff]
  %v1739 = vld [vmem:[%s16] sm:$0x1]
  %v1741 = vperm.slane %v1739, 0
  %v1744 = vsel %vm390, %v1730, 0
  %v1747 = vsel %vm390, %v1733, 0
  %1749 = vmatpush.msra.mxu0 0.0
  %1750 = vmatpush.msra.mxu0 0.0
  %1751 = vmatpush.msra.mxu0 0.0
  %1752 = vmatpush.msra.mxu0 0.0
  %1753 = vmatpush.msra.mxu0 0.0
  %1754 = vmatpush.msra.mxu0 0.0
  %1755 = vmatpush.msra.mxu0 0.0
  %1756 = vmatpush.msra.mxu0 0.0
  %1757 = vmatpush.msra.mxu0 0.0
  %1758 = vmatpush.msra.mxu0 0.0
  %1759 = vmatpush.msra.mxu0 0.0
  %1760 = vmatpush.msra.mxu0 0.0
  %1761 = vmatpush.msra.mxu0 %v1738
  %1762 = vmatpush.msra.mxu0 %v1737
  %1763 = vmatpush.msra.mxu0 %v1736
  %1764 = vmatpush.msra.mxu0 %v1735
  %1765 = vmatmul.f32.gmra.mxu0 %v1744
  %v1766 = vpop.f32.mrf.mxu0
  %v1767 = vadd.f32 %v1741, %v1766
  %1768 = vmatmul.f32.gmra.mxu0 %v1747
  %v1769 = vpop.f32.mrf.mxu0
  %v1770 = vadd.f32 %v1741, %v1769
  %1771 = vdwg.mxu0
  %v1773 = vrot.slane %v1767, 2
  %v1775 = vadd.f32 %v1767, %v1773
  %v1776 = vrot.slane %v1767, 4
  %v1778 = vadd.f32 %v1775, %v1776
  %v1779 = vrot.slane %v1767, 6
  %v1781 = vadd.f32 %v1778, %v1779
  %v1782 = vadd.f32 %v1781, %v1770
  %v1784 = vrot.slane %v1770, 2
  %v1786 = vadd.f32 %v1782, %v1784
  %v1787 = vmul.f32 %v1786, 0.16666667
  %v1788 = vld [vmem:[%s17] sm:$0xff]
  %v1789 = vld [vmem:[%s17 + $0x8] sm:$0xff]
  %v1790 = vld [vmem:[%s17 + $0x10] sm:$0xff]
  %v1791 = vld [vmem:[%s17 + $0x18] sm:$0x7f]
  %v1792 = vld [vmem:[#allocation6] sm:$0x1]
  %v1794 = vperm.slane %v1792, 0
  %vm1796 = vcmask 252928
  %v1798 = vsel %vm1796, %v1787, 0
  %v1801 = vsel %vm92, %v1791, 0
  %1803 = vmatpush.msra.mxu0 0.0
  %1804 = vmatpush.msra.mxu0 0.0
  %1805 = vmatpush.msra.mxu0 0.0
  %1806 = vmatpush.msra.mxu0 0.0
  %1807 = vmatpush.msra.mxu0 0.0
  %1808 = vmatpush.msra.mxu0 0.0
  %1809 = vmatpush.msra.mxu0 0.0
  %1810 = vmatpush.msra.mxu0 0.0
  %1811 = vmatpush.msra.mxu0 0.0
  %1812 = vmatpush.msra.mxu0 0.0
  %1813 = vmatpush.msra.mxu0 0.0
  %1814 = vmatpush.msra.mxu0 0.0
  %1815 = vmatpush.msra.mxu0 %v1801
  %1816 = vmatpush.msra.mxu0 %v1790
  %1817 = vmatpush.msra.mxu0 %v1789
  %1818 = vmatpush.msra.mxu0 %v1788
  %1819 = vmatmul.f32.gmra.mxu0 %v1798
  %v1820 = vpop.f32.mrf.mxu0
  %v1821 = vadd.f32 %v1794, %v1820
  %1822 = vdwg.mxu0
  %v1823 = vxor.u32 %v1821, 2147483648
  %v1824 = vmul.f32 %v1823, 1.442695
  %v1825 = vpow.pop %v1824
  %v1826 = vadd.f32 %v1825, 1.0
  %v1827 = vrcp.pop %v1826
  %v1828 = vmul.f32 %v1826, %v1827
  %v1829 = vsub.f32 1.0, %v1828
  %v1830 = vmul.f32 %v1827, %v1829
  %v1831 = vadd.f32 %v1827, %v1830
  %vm1832 = vweird.f32 %v1826
  %vm1833 = vweird.f32 %v1827
  %vm1834 = vmor %vm1832, %vm1833
  %v1835 = vsel %vm1834, %v1827, %v1831
  %v1836 = vand.u32 2147483647, %v1826
  %vm1837 = vcmp.eq.f32.partialorder %v1836, 8.507059e+37
  %v1838 = vand.u32 %v1826, 2147483648
  %v1839 = vor.u32 1.1754944e-38, %v1838
  %v1840 = vsel %vm1837, %v1839, %v1835
  %v1841 = vmul.f32 1.0, %v1840
  %v1843 = vrot.slane %v1841, 1
  %vm1845 = vcmask 0
  %1846 = vst.msk [vmem:[%s19] sm:$0x1] %vm1845, %v1841
  %1847 = vst.msk [vmem:[%s19 + $0x1] sm:$0x1] %vm1845, %v1843
  // Predicated region
  $region78: #{basic_model_forward.1} parent=0 // pred_check
    _
  $region79: #{basic_model_forward.1} parent=0 // pred_check_branch
    %1849 = sbr.rel (0) target = $region81
  $region80: #{basic_model_forward.1} parent=0 // pred_region
    _
  $region81: #{basic_model_forward.1} parent=0 // pred_fallthru
    _
  // Predicated region
  $region82: #{basic_model_forward.1} parent=0 // pred_check
    _
  $region83: #{basic_model_forward.1} parent=0 // pred_check_branch
    %1851 = sbr.rel (0) target = $region85
  $region84: #{basic_model_forward.1} parent=0 // pred_region
    _
  $region85: #{basic_model_forward.1} parent=0 // pred_fallthru
    _

</llo_original>
